<compile_context>
chip_gen: v7x
topology: tpu7x:2x2x1
jax: 0.10.0
libtpu: 0.0.40
codegen_flags: <defaults>
</compile_context>

<pallas_src>
import jax
import jax.numpy as jnp
from jax.experimental import pallas as pl
from jax.experimental.pallas import tpu as pltpu

Z_DIM = 20
X_DIM = 784
IN_DIM = X_DIM + Z_DIM          # 804 (x block uses the full last dim -> no (8,128) issue)
HID_DIM = 300
HID_PAD = 384                   # 300 -> 3 * 128
OUT_DIM = 2 * Z_DIM             # fused head columns: [logvar | mu]
OUT_PAD = 128                   # lane-dense output slab
TB_MAX = 1024                   # 1024-row tiles: near HBM roofline, ~10 MiB footprint


def _round_up(n, m):
    return ((n + m - 1) // m) * m


def _softplus(x):
    # Numerically stable softplus (== F.softplus(beta=1)).
    return jnp.maximum(x, 0.0) + jnp.log1p(jnp.exp(-jnp.abs(x)))


def r_v_kernel(x_ref, w1_ref, b1_ref, wh_ref, bh_ref, out_ref):
    # x: (TB, IN_DIM) caller dtype | w1: (IN_DIM, HID_PAD) bf16 | b1: (1, HID_PAD) f32
    x = x_ref[...].astype(jnp.bfloat16)          # in-kernel cast: VPU work hidden under DMA
    h = jnp.dot(x, w1_ref[...], preferred_element_type=jnp.float32) + b1_ref[...]
    h1 = _softplus(h)                            # (TB, HID_PAD) f32
    out = jnp.dot(h1.astype(wh_ref.dtype), wh_ref[...],
                  preferred_element_type=jnp.float32) + bh_ref[...]
    out_ref[...] = out.astype(out_ref.dtype)     # (TB, OUT_PAD) bf16 slab


def prepare_params(params):
    """One-time packing: fuse fc21/fc22, zero-pad to MXU-aligned shapes,
    cast matmul operands to bf16 (biases stay f32)."""
    w1, b1, w21, b21, w22, b22 = params          # w: (in, out), b: (1, out), f32
    # Fused head columns: [0:20] = fc21 (logvar), [20:40] = fc22 (mu).
    w_head = jnp.concatenate([w21, w22], axis=1)             # (300, 40)
    b_head = jnp.concatenate([b21, b22], axis=1)             # (1, 40)
    # Zero-pad: padded hidden units see h = 0 -> softplus = log 2, but the
    # corresponding head-weight rows are exactly zero so they contribute 0.
    w1_p = jnp.zeros((IN_DIM, HID_PAD), jnp.float32).at[:, :HID_DIM].set(w1)
    b1_p = jnp.zeros((1, HID_PAD), jnp.float32).at[:, :HID_DIM].set(b1)
    wh_p = jnp.zeros((HID_PAD, OUT_PAD), jnp.float32).at[:HID_DIM, :OUT_DIM].set(w_head)
    bh_p = jnp.zeros((1, OUT_PAD), jnp.float32).at[:, :OUT_DIM].set(b_head)
    return (w1_p.astype(jnp.bfloat16), b1_p,
            wh_p.astype(jnp.bfloat16), bh_p)


def _pick_tb(B):
    """Batch-tile size.  Tiny B -> one exact block (block dim == array dim, always
    layout-legal); moderate B -> >=2 blocks so the 'parallel' axis uses both v7x
    TensorCores; large B -> capped at TB_MAX."""
    if B <= 64:
        return B
    if B <= 2 * TB_MAX:
        return _round_up((B + 1) // 2, 16)
    return TB_MAX


def r_v_forward(x, prepared):
    """x: reshapeable to (N, 804), f32 or bf16.  Returns (mu, logvar), each (N, 20) f32."""
    w1_p, b1_p, wh_p, bh_p = prepared
    x = x.reshape(-1, IN_DIM)                    # like x.view(-1, 784 + z_dim)
    B = x.shape[0]
    TB = _pick_tb(B)
    num_blocks = pl.cdiv(B, TB)                  # ragged last block handled by Pallas

    out = pl.pallas_call(
        r_v_kernel,
        out_shape=jax.ShapeDtypeStruct((B, OUT_PAD), jnp.bfloat16),
        grid=(num_blocks,),
        in_specs=[
            pl.BlockSpec((TB, IN_DIM), lambda i: (i, 0)),        # x tile (pipelined)
            pl.BlockSpec((IN_DIM, HID_PAD), lambda i: (0, 0)),   # VMEM-resident weights
            pl.BlockSpec((1, HID_PAD), lambda i: (0, 0)),
            pl.BlockSpec((HID_PAD, OUT_PAD), lambda i: (0, 0)),
            pl.BlockSpec((1, OUT_PAD), lambda i: (0, 0)),
        ],
        out_specs=pl.BlockSpec((TB, OUT_PAD), lambda i: (i, 0)),
        compiler_params=pltpu.CompilerParams(
            dimension_semantics=("parallel",),
            vmem_limit_bytes=32 * 1024 * 1024),  # raises v5e's 16 MiB default; safe on v7x
    )(x, w1_p, b1_p, wh_p, bh_p)

    # Single pass over the padded slab: slice the 40 useful lanes once, upcast there.
    y = out[:, :OUT_DIM].astype(jnp.float32)
    logvar = y[:, :Z_DIM]                        # fc21 head
    mu = y[:, Z_DIM:OUT_DIM]                     # fc22 head
    return mu, logvar


def init_params(key):
    """Deterministic init mimicking nn.Linear default U(-1/sqrt(fan_in), +)."""
    ks = jax.random.split(key, 6)

    def linear(kw, kb, fan_in, fan_out):
        bound = 1.0 / jnp.sqrt(fan_in)
        w = jax.random.uniform(kw, (fan_in, fan_out), jnp.float32, -bound, bound)
        b = jax.random.uniform(kb, (1, fan_out), jnp.float32, -bound, bound)
        return w, b

    w1, b1 = linear(ks[0], ks[1], IN_DIM, HID_DIM)
    w21, b21 = linear(ks[2], ks[3], HID_DIM, Z_DIM)
    w22, b22 = linear(ks[4], ks[5], HID_DIM, Z_DIM)
    return (w1, b1, w21, b21, w22, b22)


def ref_forward_bf16(x, params):
    """Pure-JAX reference matching the kernel's bf16-operand / f32-accumulate math."""
    w1, b1, w21, b21, w22, b22 = params
    bf = jnp.bfloat16
    h1 = _softplus(jnp.dot(x.astype(bf), w1.astype(bf),
                           preferred_element_type=jnp.float32) + b1)
    logvar = jnp.dot(h1.astype(bf), w21.astype(bf),
                     preferred_element_type=jnp.float32) + b21
    mu = jnp.dot(h1.astype(bf), w22.astype(bf),
                 preferred_element_type=jnp.float32) + b22
    return mu, logvar


if __name__ == "__main__":
    key = jax.random.PRNGKey(0)
    k_in, k_in2, k_par = jax.random.split(key, 3)

    params = init_params(k_par)
    prepared = prepare_params(params)

    # Small, exactly-tiled batch.
    B = 8
    x = jax.random.normal(k_in, (B, IN_DIM), jnp.float32)     # (8, 804)
    mu, logvar = r_v_forward(x, prepared)
    jax.block_until_ready((mu, logvar))
    assert mu.shape == (B, Z_DIM) and logvar.shape == (B, Z_DIM)

    mu_ref, logvar_ref = ref_forward_bf16(x, params)
    # bf16 output slab adds ~0.4% relative rounding on top of bf16 MXU operands.
    assert jnp.allclose(mu, mu_ref, atol=2e-2, rtol=2e-2), "mu mismatch"
    assert jnp.allclose(logvar, logvar_ref, atol=2e-2, rtol=2e-2), "logvar mismatch"

    # Loose sanity check vs pure-f32 math.
    w1, b1, w21, b21, w22, b22 = params
    h1_f32 = _softplus(x @ w1 + b1)
    assert jnp.allclose(mu, h1_f32 @ w22 + b22, atol=1e-1), "mu f32 sanity"
    assert jnp.allclose(logvar, h1_f32 @ w21 + b21, atol=1e-1), "logvar f32 sanity"

    # Ragged batch: exercises the no-pad cdiv grid (2 blocks of 48 covering 70 rows;
    # the garbage rows of the last block are computed but masked on store).
    B2 = 70
    x2 = jax.random.normal(k_in2, (B2, IN_DIM), jnp.float32)
    mu2, logvar2 = r_v_forward(x2, prepared)
    jax.block_until_ready((mu2, logvar2))
    assert mu2.shape == (B2, Z_DIM) and logvar2.shape == (B2, Z_DIM)
    mu2_ref, logvar2_ref = ref_forward_bf16(x2, params)
    assert jnp.allclose(mu2, mu2_ref, atol=2e-2, rtol=2e-2), "ragged mu mismatch"
    assert jnp.allclose(logvar2, logvar2_ref, atol=2e-2, rtol=2e-2), "ragged logvar mismatch"

    print("KERNEL_OK")
</pallas_src>

<mosaic_0001>
module attributes {stable_mosaic.version = 11 : i64} {
  func.func @r_v_kernel(%arg0: i32, %arg1: memref<8x804xf32, #tpu.memory_space<vmem>>, %arg2: memref<804x384xbf16, #tpu.memory_space<vmem>>, %arg3: memref<1x384xf32, #tpu.memory_space<vmem>>, %arg4: memref<384x128xbf16, #tpu.memory_space<vmem>>, %arg5: memref<1x128xf32, #tpu.memory_space<vmem>>, %arg6: memref<8x128xbf16, #tpu.memory_space<vmem>>) attributes {dimension_semantics = [#tpu.dimension_semantics<parallel>], iteration_bounds = array<i64: 1>, scalar_prefetch = 0 : i64, scratch_operands = 0 : i64, tpu.core_type = #tpu.core_type<tc>, window_params = [{transform_indices = @transform_0, window_bounds = array<i64: 8, 804>}, {pipeline_mode = #tpu.pipeline_mode<synchronous>, transform_indices = @transform_1, window_bounds = array<i64: 804, 384>}, {pipeline_mode = #tpu.pipeline_mode<synchronous>, transform_indices = @transform_2, window_bounds = array<i64: 1, 384>}, {pipeline_mode = #tpu.pipeline_mode<synchronous>, transform_indices = @transform_3, window_bounds = array<i64: 384, 128>}, {pipeline_mode = #tpu.pipeline_mode<synchronous>, transform_indices = @transform_4, window_bounds = array<i64: 1, 128>}, {transform_indices = @transform_5, window_bounds = array<i64: 8, 128>}]} {
    %c0 = arith.constant 0 : index
    %c0_0 = arith.constant 0 : index
    %0 = vector.load %arg1[%c0, %c0_0] : memref<8x804xf32, #tpu.memory_space<vmem>>, vector<8x804xf32>
    %1 = arith.truncf %0 : vector<8x804xf32> to vector<8x804xbf16>
    %c0_1 = arith.constant 0 : index
    %c0_2 = arith.constant 0 : index
    %2 = vector.load %arg2[%c0_1, %c0_2] : memref<804x384xbf16, #tpu.memory_space<vmem>>, vector<804x384xbf16>
    %cst = arith.constant dense<0.000000e+00> : vector<8x384xf32>
    %3 = tpu.matmul %1, %2, %cst {dimension_numbers = #tpu.dot_dimension_numbers<[1], [0], [0], [1], [0, 0, 1, 1], [], []>} : vector<8x804xbf16>, vector<804x384xbf16>, vector<8x384xf32> -> vector<8x384xf32>
    %c0_3 = arith.constant 0 : index
    %c0_4 = arith.constant 0 : index
    %4 = vector.load %arg3[%c0_3, %c0_4] : memref<1x384xf32, #tpu.memory_space<vmem>>, vector<1x384xf32>
    %5 = vector.broadcast %4 : vector<1x384xf32> to vector<8x384xf32>
    %6 = arith.addf %3, %5 : vector<8x384xf32>
    %cst_5 = arith.constant 0.000000e+00 : f32
    %7 = vector.broadcast %cst_5 : f32 to vector<8x384xf32>
    %8 = arith.maximumf %6, %7 : vector<8x384xf32>
    %9 = math.absf %6 : vector<8x384xf32>
    %cst_6 = arith.constant 0.000000e+00 : f32
    %10 = vector.broadcast %cst_6 : f32 to vector<8x384xf32>
    %11 = arith.subf %10, %9 : vector<8x384xf32>
    %12 = math.exp %11 : vector<8x384xf32>
    %13 = math.log1p %12 : vector<8x384xf32>
    %14 = arith.addf %8, %13 : vector<8x384xf32>
    %15 = arith.truncf %14 : vector<8x384xf32> to vector<8x384xbf16>
    %c0_7 = arith.constant 0 : index
    %c0_8 = arith.constant 0 : index
    %16 = vector.load %arg4[%c0_7, %c0_8] : memref<384x128xbf16, #tpu.memory_space<vmem>>, vector<384x128xbf16>
    %cst_9 = arith.constant dense<0.000000e+00> : vector<8x128xf32>
    %17 = tpu.matmul %15, %16, %cst_9 {dimension_numbers = #tpu.dot_dimension_numbers<[1], [0], [0], [1], [0, 0, 1, 1], [], []>} : vector<8x384xbf16>, vector<384x128xbf16>, vector<8x128xf32> -> vector<8x128xf32>
    %c0_10 = arith.constant 0 : index
    %c0_11 = arith.constant 0 : index
    %18 = vector.load %arg5[%c0_10, %c0_11] : memref<1x128xf32, #tpu.memory_space<vmem>>, vector<1x128xf32>
    %19 = vector.broadcast %18 : vector<1x128xf32> to vector<8x128xf32>
    %20 = arith.addf %17, %19 : vector<8x128xf32>
    %21 = arith.truncf %20 : vector<8x128xf32> to vector<8x128xbf16>
    %c0_12 = arith.constant 0 : index
    %c0_13 = arith.constant 0 : index
    %22 = vector.load %arg6[%c0_12, %c0_13] : memref<8x128xbf16, #tpu.memory_space<vmem>>, vector<8x128xbf16>
    tpu.vector_store %arg6[%c0_12, %c0_13], %21 {strides = array<i32>} : memref<8x128xbf16, #tpu.memory_space<vmem>>, vector<8x128xbf16>,
    return
  }
  func.func @transform_0(%arg0: i32) -> (i32, i32) {
    %c0_i32 = arith.constant 0 : i32
    %c0_i32_0 = arith.constant 0 : i32
    return %arg0, %c0_i32 : i32, i32
  }
  func.func @transform_1(%arg0: i32) -> (i32, i32) {
    %c0_i32 = arith.constant 0 : i32
    %c0_i32_0 = arith.constant 0 : i32
    %c0_i32_1 = arith.constant 0 : i32
    return %c0_i32, %c0_i32_0 : i32, i32
  }
  func.func @transform_2(%arg0: i32) -> (i32, i32) {
    %c0_i32 = arith.constant 0 : i32
    %c0_i32_0 = arith.constant 0 : i32
    %c0_i32_1 = arith.constant 0 : i32
    return %c0_i32, %c0_i32_0 : i32, i32
  }
  func.func @transform_3(%arg0: i32) -> (i32, i32) {
    %c0_i32 = arith.constant 0 : i32
    %c0_i32_0 = arith.constant 0 : i32
    %c0_i32_1 = arith.constant 0 : i32
    return %c0_i32, %c0_i32_0 : i32, i32
  }
  func.func @transform_4(%arg0: i32) -> (i32, i32) {
    %c0_i32 = arith.constant 0 : i32
    %c0_i32_0 = arith.constant 0 : i32
    %c0_i32_1 = arith.constant 0 : i32
    return %c0_i32, %c0_i32_0 : i32, i32
  }
  func.func @transform_5(%arg0: i32) -> (i32, i32) {
    %c0_i32 = arith.constant 0 : i32
    %c0_i32_0 = arith.constant 0 : i32
    return %arg0, %c0_i32 : i32, i32
  }
}

</mosaic_0001>

<llo_original>
// kernel: tpu_custom_call.1
$region0: #{tpu_custom_call.1}
  #allocation0 [shape = 'u32[]', space=smem, size = 0x4, offset = 0x4, fixed_abs, tag = 'smem constant byte address 0x4 - core index']
  #allocation1 [shape = 'u32[144,128]{1,0:T(1,128)}', space=vmem, size = 0x12000, scoped, tag = 'internal scratch']
  %s0 = inlined_call_operand.hbm [shape: f32[8,804], index: 0, kind: input, shape index: {}]
  %s1 = inlined_call_operand.hbm [shape: bf16[804,384], index: 1, kind: input, shape index: {}]
  %s2 = inlined_call_operand.vmem [shape: f32[1,384], index: 2, kind: input, shape index: {}]
  %s3 = inlined_call_operand.hbm [shape: bf16[384,128], index: 3, kind: input, shape index: {}]
  %s4 = inlined_call_operand.vmem [shape: f32[1,128], index: 4, kind: input, shape index: {}]
  %s5 = inlined_call_operand.hbm [shape: bf16[8,128], index: 5, kind: output, shape index: {}]
  %s6 = sld [smem:[#allocation0]]
  $region42: #{tpu_custom_call.1} parent=0
    _
  %s8 = ssub.s32 1, %s6
  %s9 = scalar_select 0, %s8, %s6
  $region1: #{tpu_custom_call.1} parent=0
    #allocation2 [shape = 'u8[28672]{0}', space=vmem, size = 0x7000, scoped, tag = 'input window, operand 0, single buffered']
    #allocation3 [shape = 's32[1]{0}', space=sflag, size = 0x4, scoped, tag = 'scoped memory for tpu_custom_call.1']
    #allocation4 [shape = 's32[1]{0}', space=sflag, size = 0x4, scoped, tag = 'scoped memory for tpu_custom_call.1']
    #allocation5 [shape = 'u8[620544]{0}', space=vmem, size = 0x97800, scoped, tag = 'input window, operand 1, single buffered']
    #allocation6 [shape = 's32[1]{0}', space=sflag, size = 0x4, scoped, tag = 'scoped memory for tpu_custom_call.1']
    #allocation7 [shape = 'u8[98304]{0}', space=vmem, size = 0x18000, scoped, tag = 'input window, operand 3, single buffered']
    #allocation8 [shape = 'u8[2048]{0}', space=vmem, size = 0x800, scoped, tag = 'output window, operand 0, single buffered']
    %10 = vsyncpa [#allocation3], 0
    %11 = vsyncpa [#allocation6], 0
    %12 = vsyncpa [#allocation4], 0
    // Predicated region
    $region2: #{tpu_custom_call.1} parent=1 // pred_check
      _
    $region3: #{tpu_custom_call.1} parent=1 // pred_check_branch
      %14 = sbr.rel (0) target = $region5
    $region4: #{tpu_custom_call.1} parent=1 // pred_region
      %s16 = ssub.s32 896, 896
      %17 = vsyncadd [#allocation3], %s16
      %s19 = sshll.u32 [#allocation2], 4
      %s20 = int_to_ptr.vmem [resolvable:$true] %s19
      %22 = dma.hbm_to_vmem [thread:$0]  %s0, 896, %s20, [#allocation3]
    $region5: #{tpu_custom_call.1} parent=1 // pred_fallthru
      _
    // Predicated region
    $region6: #{tpu_custom_call.1} parent=1 // pred_check
      _
    $region7: #{tpu_custom_call.1} parent=1 // pred_check_branch
      %24 = sbr.rel (0) target = $region9
    $region8: #{tpu_custom_call.1} parent=1 // pred_region
      %s26 = ssub.s32 19392, 19392
      %27 = vsyncadd [#allocation6], %s26
      %s28 = sshll.u32 [#allocation5], 4
      %s29 = int_to_ptr.vmem [resolvable:$true] %s28
      %34 = dma.hbm_to_vmem [thread:$0]  %s1, 19392, %s29, [#allocation6], 192, 192, 12
    $region9: #{tpu_custom_call.1} parent=1 // pred_fallthru
      _
    // Predicated region
    $region10: #{tpu_custom_call.1} parent=1 // pred_check
      _
    $region11: #{tpu_custom_call.1} parent=1 // pred_check_branch
      %36 = sbr.rel (0) target = $region13
    $region12: #{tpu_custom_call.1} parent=1 // pred_region
      _
    $region13: #{tpu_custom_call.1} parent=1 // pred_fallthru
      _
    // Predicated region
    $region14: #{tpu_custom_call.1} parent=1 // pred_check
      _
    $region15: #{tpu_custom_call.1} parent=1 // pred_check_branch
      %38 = sbr.rel (0) target = $region17
    $region16: #{tpu_custom_call.1} parent=1 // pred_region
      %s40 = ssub.s32 3072, 3072
      %41 = vsyncadd [#allocation6], %s40
      %s42 = sshll.u32 [#allocation7], 4
      %s43 = int_to_ptr.vmem [resolvable:$true] %s42
      %48 = dma.hbm_to_vmem [thread:$0]  %s3, 3072, %s43, [#allocation6], 64, 64, 4
    $region17: #{tpu_custom_call.1} parent=1 // pred_fallthru
      _
    // Predicated region
    $region18: #{tpu_custom_call.1} parent=1 // pred_check
      _
    $region19: #{tpu_custom_call.1} parent=1 // pred_check_branch
      %50 = sbr.rel (0) target = $region21
    $region20: #{tpu_custom_call.1} parent=1 // pred_region
      _
    $region21: #{tpu_custom_call.1} parent=1 // pred_fallthru
      _
    // Predicated region
    $region22: #{tpu_custom_call.1} parent=1 // pred_check
      _
    $region23: #{tpu_custom_call.1} parent=1 // pred_check_branch
      %52 = sbr.rel (0) target = $region25
    $region24: #{tpu_custom_call.1} parent=1 // pred_region
      %53 = dma.done [#allocation3], 896
    $region25: #{tpu_custom_call.1} parent=1 // pred_fallthru
      _
    // Predicated region
    $region26: #{tpu_custom_call.1} parent=1 // pred_check
      _
    $region27: #{tpu_custom_call.1} parent=1 // pred_check_branch
      %55 = sbr.rel (0) target = $region29
    $region28: #{tpu_custom_call.1} parent=1 // pred_region
      %56 = dma.done [#allocation6], 19392
    $region29: #{tpu_custom_call.1} parent=1 // pred_fallthru
      _
    // Predicated region
    $region30: #{tpu_custom_call.1} parent=1 // pred_check
      _
    $region31: #{tpu_custom_call.1} parent=1 // pred_check_branch
      %58 = sbr.rel (0) target = $region33
    $region32: #{tpu_custom_call.1} parent=1 // pred_region
      %59 = dma.done [#allocation6], 3072
    $region33: #{tpu_custom_call.1} parent=1 // pred_fallthru
      _
    %v61 = vld [vmem:[#allocation2] sm:$0xff]
    %v62 = vld [vmem:[#allocation2 + $0x8] sm:$0xff]
    %v63 = vld [vmem:[#allocation2 + $0x10] sm:$0xff]
    %v64 = vld [vmem:[#allocation2 + $0x18] sm:$0xff]
    %v65 = vld [vmem:[#allocation2 + $0x20] sm:$0xff]
    %v66 = vld [vmem:[#allocation2 + $0x28] sm:$0xff]
    %v67 = vld [vmem:[#allocation2 + $0x30] sm:$0xff]
    %v68 = vpack.c.bf16 %v61, %v61
    %v69 = vpack.c.bf16 %v62, %v62
    %v70 = vpack.c.bf16 %v63, %v63
    %v71 = vpack.c.bf16 %v64, %v64
    %v72 = vpack.c.bf16 %v65, %v65
    %v73 = vpack.c.bf16 %v66, %v66
    %v74 = vpack.c.bf16 %v67, %v67
    %v75 = vld [vmem:[#allocation5] sm:$0xff]
    %v76 = vld [vmem:[#allocation5 + $0x8] sm:$0xf]
    %v77 = vld [vmem:[#allocation5 + $0xc] sm:$0xff]
    %v78 = vld [vmem:[#allocation5 + $0x14] sm:$0xf]
    %v79 = vld [vmem:[#allocation5 + $0x18] sm:$0xff]
    %v80 = vld [vmem:[#allocation5 + $0x20] sm:$0xf]
    %v81 = vld [vmem:[#allocation5 + $0x24] sm:$0xff]
    %v82 = vld [vmem:[#allocation5 + $0x2c] sm:$0xf]
    %v83 = vld [vmem:[#allocation5 + $0x30] sm:$0xff]
    %v84 = vld [vmem:[#allocation5 + $0x38] sm:$0xf]
    %v85 = vld [vmem:[#allocation5 + $0x3c] sm:$0xff]
    %v86 = vld [vmem:[#allocation5 + $0x44] sm:$0xf]
    %v87 = vld [vmem:[#allocation5 + $0x48] sm:$0xff]
    %v88 = vld [vmem:[#allocation5 + $0x50] sm:$0xf]
    %v89 = vld [vmem:[#allocation5 + $0x54] sm:$0xff]
    %v90 = vld [vmem:[#allocation5 + $0x5c] sm:$0xf]
    %v91 = vld [vmem:[#allocation5 + $0x60] sm:$0xff]
    %v92 = vld [vmem:[#allocation5 + $0x68] sm:$0xf]
    %v93 = vld [vmem:[#allocation5 + $0x6c] sm:$0xff]
    %v94 = vld [vmem:[#allocation5 + $0x74] sm:$0xf]
    %v95 = vld [vmem:[#allocation5 + $0x78] sm:$0xff]
    %v96 = vld [vmem:[#allocation5 + $0x80] sm:$0xf]
    %v97 = vld [vmem:[#allocation5 + $0x84] sm:$0xff]
    %v98 = vld [vmem:[#allocation5 + $0x8c] sm:$0xf]
    %v99 = vld [vmem:[#allocation5 + $0x90] sm:$0xff]
    %v100 = vld [vmem:[#allocation5 + $0x98] sm:$0xf]
    %v101 = vld [vmem:[#allocation5 + $0x9c] sm:$0xff]
    %v102 = vld [vmem:[#allocation5 + $0xa4] sm:$0xf]
    %v103 = vld [vmem:[#allocation5 + $0xa8] sm:$0xff]
    %v104 = vld [vmem:[#allocation5 + $0xb0] sm:$0xf]
    %v105 = vld [vmem:[#allocation5 + $0xb4] sm:$0xff]
    %v106 = vld [vmem:[#allocation5 + $0xbc] sm:$0xf]
    %v107 = vld [vmem:[#allocation5 + $0xc0] sm:$0xff]
    %v108 = vld [vmem:[#allocation5 + $0xc8] sm:$0xf]
    %v109 = vld [vmem:[#allocation5 + $0xcc] sm:$0xff]
    %v110 = vld [vmem:[#allocation5 + $0xd4] sm:$0xf]
    %v111 = vld [vmem:[#allocation5 + $0xd8] sm:$0xff]
    %v112 = vld [vmem:[#allocation5 + $0xe0] sm:$0xf]
    %v113 = vld [vmem:[#allocation5 + $0xe4] sm:$0xff]
    %v114 = vld [vmem:[#allocation5 + $0xec] sm:$0xf]
    %v115 = vld [vmem:[#allocation5 + $0xf0] sm:$0xff]
    %v116 = vld [vmem:[#allocation5 + $0xf8] sm:$0xf]
    %v117 = vld [vmem:[#allocation5 + $0xfc] sm:$0xff]
    %v118 = vld [vmem:[#allocation5 + $0x104] sm:$0xf]
    %v119 = vld [vmem:[#allocation5 + $0x108] sm:$0xff]
    %v120 = vld [vmem:[#allocation5 + $0x110] sm:$0xf]
    %v121 = vld [vmem:[#allocation5 + $0x114] sm:$0xff]
    %v122 = vld [vmem:[#allocation5 + $0x11c] sm:$0xf]
    %v123 = vld [vmem:[#allocation5 + $0x120] sm:$0xff]
    %v124 = vld [vmem:[#allocation5 + $0x128] sm:$0xf]
    %v125 = vld [vmem:[#allocation5 + $0x12c] sm:$0xff]
    %v126 = vld [vmem:[#allocation5 + $0x134] sm:$0xf]
    %v127 = vld [vmem:[#allocation5 + $0x138] sm:$0xff]
    %v128 = vld [vmem:[#allocation5 + $0x140] sm:$0xf]
    %v129 = vld [vmem:[#allocation5 + $0x144] sm:$0xff]
    %v130 = vld [vmem:[#allocation5 + $0x14c] sm:$0xf]
    %v131 = vld [vmem:[#allocation5 + $0x150] sm:$0xff]
    %v132 = vld [vmem:[#allocation5 + $0x158] sm:$0xf]
    %v133 = vld [vmem:[#allocation5 + $0x15c] sm:$0xff]
    %v134 = vld [vmem:[#allocation5 + $0x164] sm:$0xf]
    %v135 = vld [vmem:[#allocation5 + $0x168] sm:$0xff]
    %v136 = vld [vmem:[#allocation5 + $0x170] sm:$0xf]
    %v137 = vld [vmem:[#allocation5 + $0x174] sm:$0xff]
    %v138 = vld [vmem:[#allocation5 + $0x17c] sm:$0xf]
    %v139 = vld [vmem:[#allocation5 + $0x180] sm:$0xff]
    %v140 = vld [vmem:[#allocation5 + $0x188] sm:$0xf]
    %v141 = vld [vmem:[#allocation5 + $0x18c] sm:$0xff]
    %v142 = vld [vmem:[#allocation5 + $0x194] sm:$0xf]
    %v143 = vld [vmem:[#allocation5 + $0x198] sm:$0xff]
    %v144 = vld [vmem:[#allocation5 + $0x1a0] sm:$0xf]
    %v145 = vld [vmem:[#allocation5 + $0x1a4] sm:$0xff]
    %v146 = vld [vmem:[#allocation5 + $0x1ac] sm:$0xf]
    %v147 = vld [vmem:[#allocation5 + $0x1b0] sm:$0xff]
    %v148 = vld [vmem:[#allocation5 + $0x1b8] sm:$0xf]
    %v149 = vld [vmem:[#allocation5 + $0x1bc] sm:$0xff]
    %v150 = vld [vmem:[#allocation5 + $0x1c4] sm:$0xf]
    %v151 = vld [vmem:[#allocation5 + $0x1c8] sm:$0xff]
    %v152 = vld [vmem:[#allocation5 + $0x1d0] sm:$0xf]
    %v153 = vld [vmem:[#allocation5 + $0x1d4] sm:$0xff]
    %v154 = vld [vmem:[#allocation5 + $0x1dc] sm:$0xf]
    %v155 = vld [vmem:[#allocation5 + $0x1e0] sm:$0xff]
    %v156 = vld [vmem:[#allocation5 + $0x1e8] sm:$0xf]
    %v157 = vld [vmem:[#allocation5 + $0x1ec] sm:$0xff]
    %v158 = vld [vmem:[#allocation5 + $0x1f4] sm:$0xf]
    %v159 = vld [vmem:[#allocation5 + $0x1f8] sm:$0xff]
    %v160 = vld [vmem:[#allocation5 + $0x200] sm:$0xf]
    %v161 = vld [vmem:[#allocation5 + $0x204] sm:$0xff]
    %v162 = vld [vmem:[#allocation5 + $0x20c] sm:$0xf]
    %v163 = vld [vmem:[#allocation5 + $0x210] sm:$0xff]
    %v164 = vld [vmem:[#allocation5 + $0x218] sm:$0xf]
    %v165 = vld [vmem:[#allocation5 + $0x21c] sm:$0xff]
    %v166 = vld [vmem:[#allocation5 + $0x224] sm:$0xf]
    %v167 = vld [vmem:[#allocation5 + $0x228] sm:$0xff]
    %v168 = vld [vmem:[#allocation5 + $0x230] sm:$0xf]
    %v169 = vld [vmem:[#allocation5 + $0x234] sm:$0xff]
    %v170 = vld [vmem:[#allocation5 + $0x23c] sm:$0xf]
    %v171 = vld [vmem:[#allocation5 + $0x240] sm:$0xff]
    %v172 = vld [vmem:[#allocation5 + $0x248] sm:$0xf]
    %v173 = vld [vmem:[#allocation5 + $0x24c] sm:$0xff]
    %v174 = vld [vmem:[#allocation5 + $0x254] sm:$0xf]
    %v175 = vld [vmem:[#allocation5 + $0x258] sm:$0xff]
    %v176 = vld [vmem:[#allocation5 + $0x260] sm:$0xf]
    %v177 = vld [vmem:[#allocation5 + $0x264] sm:$0xff]
    %v178 = vld [vmem:[#allocation5 + $0x26c] sm:$0xf]
    %v179 = vld [vmem:[#allocation5 + $0x270] sm:$0xff]
    %v180 = vld [vmem:[#allocation5 + $0x278] sm:$0xf]
    %v181 = vld [vmem:[#allocation5 + $0x27c] sm:$0xff]
    %v182 = vld [vmem:[#allocation5 + $0x284] sm:$0xf]
    %v183 = vld [vmem:[#allocation5 + $0x288] sm:$0xff]
    %v184 = vld [vmem:[#allocation5 + $0x290] sm:$0xf]
    %v185 = vld [vmem:[#allocation5 + $0x294] sm:$0xff]
    %v186 = vld [vmem:[#allocation5 + $0x29c] sm:$0xf]
    %v187 = vld [vmem:[#allocation5 + $0x2a0] sm:$0xff]
    %v188 = vld [vmem:[#allocation5 + $0x2a8] sm:$0xf]
    %v189 = vld [vmem:[#allocation5 + $0x2ac] sm:$0xff]
    %v190 = vld [vmem:[#allocation5 + $0x2b4] sm:$0xf]
    %v191 = vld [vmem:[#allocation5 + $0x2b8] sm:$0xff]
    %v192 = vld [vmem:[#allocation5 + $0x2c0] sm:$0xf]
    %v193 = vld [vmem:[#allocation5 + $0x2c4] sm:$0xff]
    %v194 = vld [vmem:[#allocation5 + $0x2cc] sm:$0xf]
    %v195 = vld [vmem:[#allocation5 + $0x2d0] sm:$0xff]
    %v196 = vld [vmem:[#allocation5 + $0x2d8] sm:$0xf]
    %v197 = vld [vmem:[#allocation5 + $0x2dc] sm:$0xff]
    %v198 = vld [vmem:[#allocation5 + $0x2e4] sm:$0xf]
    %v199 = vld [vmem:[#allocation5 + $0x2e8] sm:$0xff]
    %v200 = vld [vmem:[#allocation5 + $0x2f0] sm:$0xf]
    %v201 = vld [vmem:[#allocation5 + $0x2f4] sm:$0xff]
    %v202 = vld [vmem:[#allocation5 + $0x2fc] sm:$0xf]
    %v203 = vld [vmem:[#allocation5 + $0x300] sm:$0xff]
    %v204 = vld [vmem:[#allocation5 + $0x308] sm:$0xf]
    %v205 = vld [vmem:[#allocation5 + $0x30c] sm:$0xff]
    %v206 = vld [vmem:[#allocation5 + $0x314] sm:$0xf]
    %v207 = vld [vmem:[#allocation5 + $0x318] sm:$0xff]
    %v208 = vld [vmem:[#allocation5 + $0x320] sm:$0xf]
    %v209 = vld [vmem:[#allocation5 + $0x324] sm:$0xff]
    %v210 = vld [vmem:[#allocation5 + $0x32c] sm:$0xf]
    %v211 = vld [vmem:[#allocation5 + $0x330] sm:$0xff]
    %v212 = vld [vmem:[#allocation5 + $0x338] sm:$0xf]
    %v213 = vld [vmem:[#allocation5 + $0x33c] sm:$0xff]
    %v214 = vld [vmem:[#allocation5 + $0x344] sm:$0xf]
    %v215 = vld [vmem:[#allocation5 + $0x348] sm:$0xff]
    %v216 = vld [vmem:[#allocation5 + $0x350] sm:$0xf]
    %v217 = vld [vmem:[#allocation5 + $0x354] sm:$0xff]
    %v218 = vld [vmem:[#allocation5 + $0x35c] sm:$0xf]
    %v219 = vld [vmem:[#allocation5 + $0x360] sm:$0xff]
    %v220 = vld [vmem:[#allocation5 + $0x368] sm:$0xf]
    %v221 = vld [vmem:[#allocation5 + $0x36c] sm:$0xff]
    %v222 = vld [vmem:[#allocation5 + $0x374] sm:$0xf]
    %v223 = vld [vmem:[#allocation5 + $0x378] sm:$0xff]
    %v224 = vld [vmem:[#allocation5 + $0x380] sm:$0xf]
    %v225 = vld [vmem:[#allocation5 + $0x384] sm:$0xff]
    %v226 = vld [vmem:[#allocation5 + $0x38c] sm:$0xf]
    %v227 = vld [vmem:[#allocation5 + $0x390] sm:$0xff]
    %v228 = vld [vmem:[#allocation5 + $0x398] sm:$0xf]
    %v229 = vld [vmem:[#allocation5 + $0x39c] sm:$0xff]
    %v230 = vld [vmem:[#allocation5 + $0x3a4] sm:$0xf]
    %v231 = vld [vmem:[#allocation5 + $0x3a8] sm:$0xff]
    %v232 = vld [vmem:[#allocation5 + $0x3b0] sm:$0xf]
    %v233 = vld [vmem:[#allocation5 + $0x3b4] sm:$0xff]
    %v234 = vld [vmem:[#allocation5 + $0x3bc] sm:$0xf]
    %v235 = vld [vmem:[#allocation5 + $0x3c0] sm:$0xff]
    %v236 = vld [vmem:[#allocation5 + $0x3c8] sm:$0xf]
    %v237 = vld [vmem:[#allocation5 + $0x3cc] sm:$0xff]
    %v238 = vld [vmem:[#allocation5 + $0x3d4] sm:$0xf]
    %v239 = vld [vmem:[#allocation5 + $0x3d8] sm:$0xff]
    %v240 = vld [vmem:[#allocation5 + $0x3e0] sm:$0xf]
    %v241 = vld [vmem:[#allocation5 + $0x3e4] sm:$0xff]
    %v242 = vld [vmem:[#allocation5 + $0x3ec] sm:$0xf]
    %v243 = vld [vmem:[#allocation5 + $0x3f0] sm:$0xff]
    %v244 = vld [vmem:[#allocation5 + $0x3f8] sm:$0xf]
    %v245 = vld [vmem:[#allocation5 + $0x3fc] sm:$0xff]
    %v246 = vld [vmem:[#allocation5 + $0x404] sm:$0xf]
    %v247 = vld [vmem:[#allocation5 + $0x408] sm:$0xff]
    %v248 = vld [vmem:[#allocation5 + $0x410] sm:$0xf]
    %v249 = vld [vmem:[#allocation5 + $0x414] sm:$0xff]
    %v250 = vld [vmem:[#allocation5 + $0x41c] sm:$0xf]
    %v251 = vld [vmem:[#allocation5 + $0x420] sm:$0xff]
    %v252 = vld [vmem:[#allocation5 + $0x428] sm:$0xf]
    %v253 = vld [vmem:[#allocation5 + $0x42c] sm:$0xff]
    %v254 = vld [vmem:[#allocation5 + $0x434] sm:$0xf]
    %v255 = vld [vmem:[#allocation5 + $0x438] sm:$0xff]
    %v256 = vld [vmem:[#allocation5 + $0x440] sm:$0xf]
    %v257 = vld [vmem:[#allocation5 + $0x444] sm:$0xff]
    %v258 = vld [vmem:[#allocation5 + $0x44c] sm:$0xf]
    %v259 = vld [vmem:[#allocation5 + $0x450] sm:$0xff]
    %v260 = vld [vmem:[#allocation5 + $0x458] sm:$0xf]
    %v261 = vld [vmem:[#allocation5 + $0x45c] sm:$0xff]
    %v262 = vld [vmem:[#allocation5 + $0x464] sm:$0xf]
    %v263 = vld [vmem:[#allocation5 + $0x468] sm:$0xff]
    %v264 = vld [vmem:[#allocation5 + $0x470] sm:$0xf]
    %v265 = vld [vmem:[#allocation5 + $0x474] sm:$0xff]
    %v266 = vld [vmem:[#allocation5 + $0x47c] sm:$0xf]
    %v267 = vld [vmem:[#allocation5 + $0x480] sm:$0xff]
    %v268 = vld [vmem:[#allocation5 + $0x488] sm:$0xf]
    %v269 = vld [vmem:[#allocation5 + $0x48c] sm:$0xff]
    %v270 = vld [vmem:[#allocation5 + $0x494] sm:$0xf]
    %v271 = vld [vmem:[#allocation5 + $0x498] sm:$0xff]
    %v272 = vld [vmem:[#allocation5 + $0x4a0] sm:$0xf]
    %v273 = vld [vmem:[#allocation5 + $0x4a4] sm:$0xff]
    %v274 = vld [vmem:[#allocation5 + $0x4ac] sm:$0xf]
    %v275 = vld [vmem:[#allocation5 + $0x4b0] sm:$0x33]
    %v276 = vld [vmem:[#allocation5 + $0x4b8] sm:$0x3]
    %v277 = vld [vmem:[%s2] sm:$0x7]
    %v279 = vlaneseq
    %v280 = vshrl.u32 %v279, 7
    %v281 = vsub.s32 0, %v280
    %v282 = vrot.slane %v277, %v281
    %v283 = vlaneseq
    %v284 = vshrl.u32 %v283, 7
    %v285 = vsub.s32 1, %v284
    %v286 = vrot.slane %v277, %v285
    %v287 = vlaneseq
    %v288 = vshrl.u32 %v287, 7
    %v289 = vsub.s32 2, %v288
    %v290 = vrot.slane %v277, %v289
    %v496 = vunpack.c.l.b16 %v75
    %v497 = vunpack.c.h.b16 %v75
    %v498 = vunpack.c.l.b16 %v76
    %v499 = vunpack.c.l.b16 %v77
    %v500 = vunpack.c.h.b16 %v77
    %v501 = vunpack.c.l.b16 %v78
    %v502 = vunpack.c.l.b16 %v79
    %v503 = vunpack.c.h.b16 %v79
    %v504 = vunpack.c.l.b16 %v80
    %v505 = vunpack.c.l.b16 %v81
    %v506 = vunpack.c.h.b16 %v81
    %v507 = vunpack.c.l.b16 %v82
    %v508 = vunpack.c.l.b16 %v83
    %v509 = vunpack.c.h.b16 %v83
    %v510 = vunpack.c.l.b16 %v84
    %v511 = vunpack.c.l.b16 %v85
    %v512 = vunpack.c.h.b16 %v85
    %v513 = vunpack.c.l.b16 %v86
    %v514 = vunpack.c.l.b16 %v87
    %v515 = vunpack.c.h.b16 %v87
    %v516 = vunpack.c.l.b16 %v88
    %v517 = vunpack.c.l.b16 %v89
    %v518 = vunpack.c.h.b16 %v89
    %v519 = vunpack.c.l.b16 %v90
    %v520 = vunpack.c.l.b16 %v91
    %v521 = vunpack.c.h.b16 %v91
    %v522 = vunpack.c.l.b16 %v92
    %v523 = vunpack.c.l.b16 %v93
    %v524 = vunpack.c.h.b16 %v93
    %v525 = vunpack.c.l.b16 %v94
    %v526 = vunpack.c.l.b16 %v95
    %v527 = vunpack.c.h.b16 %v95
    %v528 = vunpack.c.l.b16 %v96
    %v529 = vunpack.c.l.b16 %v97
    %v530 = vunpack.c.h.b16 %v97
    %v531 = vunpack.c.l.b16 %v98
    %v532 = vunpack.c.l.b16 %v99
    %v533 = vunpack.c.h.b16 %v99
    %v534 = vunpack.c.l.b16 %v100
    %v535 = vunpack.c.l.b16 %v101
    %v536 = vunpack.c.h.b16 %v101
    %v537 = vunpack.c.l.b16 %v102
    %v538 = vunpack.c.l.b16 %v103
    %v539 = vunpack.c.h.b16 %v103
    %v540 = vunpack.c.l.b16 %v104
    %v541 = vunpack.c.l.b16 %v105
    %v542 = vunpack.c.h.b16 %v105
    %v543 = vunpack.c.l.b16 %v106
    %v544 = vunpack.c.l.b16 %v107
    %v545 = vunpack.c.h.b16 %v107
    %v546 = vunpack.c.l.b16 %v108
    %v547 = vunpack.c.l.b16 %v109
    %v548 = vunpack.c.h.b16 %v109
    %v549 = vunpack.c.l.b16 %v110
    %v550 = vunpack.c.l.b16 %v111
    %v551 = vunpack.c.h.b16 %v111
    %v552 = vunpack.c.l.b16 %v112
    %v553 = vunpack.c.l.b16 %v113
    %v554 = vunpack.c.h.b16 %v113
    %v555 = vunpack.c.l.b16 %v114
    %v556 = vunpack.c.l.b16 %v115
    %v557 = vunpack.c.h.b16 %v115
    %v558 = vunpack.c.l.b16 %v116
    %v559 = vunpack.c.l.b16 %v117
    %v560 = vunpack.c.h.b16 %v117
    %v561 = vunpack.c.l.b16 %v118
    %v562 = vunpack.c.l.b16 %v119
    %v563 = vunpack.c.h.b16 %v119
    %v564 = vunpack.c.l.b16 %v120
    %v565 = vunpack.c.l.b16 %v121
    %v566 = vunpack.c.h.b16 %v121
    %v567 = vunpack.c.l.b16 %v122
    %v568 = vunpack.c.l.b16 %v123
    %v569 = vunpack.c.h.b16 %v123
    %v570 = vunpack.c.l.b16 %v124
    %v571 = vunpack.c.l.b16 %v125
    %v572 = vunpack.c.h.b16 %v125
    %v573 = vunpack.c.l.b16 %v126
    %v574 = vunpack.c.l.b16 %v127
    %v575 = vunpack.c.h.b16 %v127
    %v576 = vunpack.c.l.b16 %v128
    %v577 = vunpack.c.l.b16 %v129
    %v578 = vunpack.c.h.b16 %v129
    %v579 = vunpack.c.l.b16 %v130
    %v580 = vunpack.c.l.b16 %v131
    %v581 = vunpack.c.h.b16 %v131
    %v582 = vunpack.c.l.b16 %v132
    %v583 = vunpack.c.l.b16 %v133
    %v584 = vunpack.c.h.b16 %v133
    %v585 = vunpack.c.l.b16 %v134
    %v586 = vunpack.c.l.b16 %v135
    %v587 = vunpack.c.h.b16 %v135
    %v588 = vunpack.c.l.b16 %v136
    %v589 = vunpack.c.l.b16 %v137
    %v590 = vunpack.c.h.b16 %v137
    %v591 = vunpack.c.l.b16 %v138
    %v592 = vunpack.c.l.b16 %v139
    %v593 = vunpack.c.h.b16 %v139
    %v594 = vunpack.c.l.b16 %v140
    %v595 = vunpack.c.l.b16 %v141
    %v596 = vunpack.c.h.b16 %v141
    %v597 = vunpack.c.l.b16 %v142
    %v598 = vunpack.c.l.b16 %v143
    %v599 = vunpack.c.h.b16 %v143
    %v600 = vunpack.c.l.b16 %v144
    %v601 = vunpack.c.l.b16 %v145
    %v602 = vunpack.c.h.b16 %v145
    %v603 = vunpack.c.l.b16 %v146
    %v604 = vunpack.c.l.b16 %v147
    %v605 = vunpack.c.h.b16 %v147
    %v606 = vunpack.c.l.b16 %v148
    %v607 = vunpack.c.l.b16 %v149
    %v608 = vunpack.c.h.b16 %v149
    %v609 = vunpack.c.l.b16 %v150
    %v610 = vunpack.c.l.b16 %v151
    %v611 = vunpack.c.h.b16 %v151
    %v612 = vunpack.c.l.b16 %v152
    %v613 = vunpack.c.l.b16 %v153
    %v614 = vunpack.c.h.b16 %v153
    %v615 = vunpack.c.l.b16 %v154
    %v616 = vunpack.c.l.b16 %v155
    %v617 = vunpack.c.h.b16 %v155
    %v618 = vunpack.c.l.b16 %v156
    %v619 = vunpack.c.l.b16 %v157
    %v620 = vunpack.c.h.b16 %v157
    %v621 = vunpack.c.l.b16 %v158
    %v622 = vunpack.c.l.b16 %v159
    %v623 = vunpack.c.h.b16 %v159
    %v624 = vunpack.c.l.b16 %v160
    %v625 = vunpack.c.l.b16 %v161
    %v626 = vunpack.c.h.b16 %v161
    %v627 = vunpack.c.l.b16 %v162
    %v628 = vunpack.c.l.b16 %v163
    %v629 = vunpack.c.h.b16 %v163
    %v630 = vunpack.c.l.b16 %v164
    %v631 = vunpack.c.l.b16 %v165
    %v632 = vunpack.c.h.b16 %v165
    %v633 = vunpack.c.l.b16 %v166
    %v634 = vunpack.c.l.b16 %v167
    %v635 = vunpack.c.h.b16 %v167
    %v636 = vunpack.c.l.b16 %v168
    %v637 = vunpack.c.l.b16 %v169
    %v638 = vunpack.c.h.b16 %v169
    %v639 = vunpack.c.l.b16 %v170
    %v640 = vunpack.c.l.b16 %v171
    %v641 = vunpack.c.h.b16 %v171
    %v642 = vunpack.c.l.b16 %v172
    %v643 = vunpack.c.l.b16 %v173
    %v644 = vunpack.c.h.b16 %v173
    %v645 = vunpack.c.l.b16 %v174
    %v646 = vunpack.c.l.b16 %v175
    %v647 = vunpack.c.h.b16 %v175
    %v648 = vunpack.c.l.b16 %v176
    %v649 = vunpack.c.l.b16 %v177
    %v650 = vunpack.c.h.b16 %v177
    %v651 = vunpack.c.l.b16 %v178
    %v652 = vunpack.c.l.b16 %v179
    %v653 = vunpack.c.h.b16 %v179
    %v654 = vunpack.c.l.b16 %v180
    %v655 = vunpack.c.l.b16 %v181
    %v656 = vunpack.c.h.b16 %v181
    %v657 = vunpack.c.l.b16 %v182
    %v658 = vunpack.c.l.b16 %v183
    %v659 = vunpack.c.h.b16 %v183
    %v660 = vunpack.c.l.b16 %v184
    %v661 = vunpack.c.l.b16 %v185
    %v662 = vunpack.c.h.b16 %v185
    %v663 = vunpack.c.l.b16 %v186
    %v664 = vunpack.c.l.b16 %v187
    %v665 = vunpack.c.h.b16 %v187
    %v666 = vunpack.c.l.b16 %v188
    %v667 = vunpack.c.l.b16 %v189
    %v668 = vunpack.c.h.b16 %v189
    %v669 = vunpack.c.l.b16 %v190
    %v670 = vunpack.c.l.b16 %v191
    %v671 = vunpack.c.h.b16 %v191
    %v672 = vunpack.c.l.b16 %v192
    %v673 = vunpack.c.l.b16 %v193
    %v674 = vunpack.c.h.b16 %v193
    %v675 = vunpack.c.l.b16 %v194
    %v676 = vunpack.c.l.b16 %v195
    %v677 = vunpack.c.h.b16 %v195
    %v678 = vunpack.c.l.b16 %v196
    %v679 = vunpack.c.l.b16 %v197
    %v680 = vunpack.c.h.b16 %v197
    %v681 = vunpack.c.l.b16 %v198
    %v682 = vunpack.c.l.b16 %v199
    %v683 = vunpack.c.h.b16 %v199
    %v684 = vunpack.c.l.b16 %v200
    %v685 = vunpack.c.l.b16 %v201
    %v686 = vunpack.c.h.b16 %v201
    %v687 = vunpack.c.l.b16 %v202
    %v688 = vunpack.c.l.b16 %v203
    %v689 = vunpack.c.h.b16 %v203
    %v690 = vunpack.c.l.b16 %v204
    %v691 = vunpack.c.l.b16 %v205
    %v692 = vunpack.c.h.b16 %v205
    %v693 = vunpack.c.l.b16 %v206
    %v694 = vunpack.c.l.b16 %v207
    %v695 = vunpack.c.h.b16 %v207
    %v696 = vunpack.c.l.b16 %v208
    %v697 = vunpack.c.l.b16 %v209
    %v698 = vunpack.c.h.b16 %v209
    %v699 = vunpack.c.l.b16 %v210
    %v700 = vunpack.c.l.b16 %v211
    %v701 = vunpack.c.h.b16 %v211
    %v702 = vunpack.c.l.b16 %v212
    %v703 = vunpack.c.l.b16 %v213
    %v704 = vunpack.c.h.b16 %v213
    %v705 = vunpack.c.l.b16 %v214
    %v706 = vunpack.c.l.b16 %v215
    %v707 = vunpack.c.h.b16 %v215
    %v708 = vunpack.c.l.b16 %v216
    %v709 = vunpack.c.l.b16 %v217
    %v710 = vunpack.c.h.b16 %v217
    %v711 = vunpack.c.l.b16 %v218
    %v712 = vunpack.c.l.b16 %v219
    %v713 = vunpack.c.h.b16 %v219
    %v714 = vunpack.c.l.b16 %v220
    %v715 = vunpack.c.l.b16 %v221
    %v716 = vunpack.c.h.b16 %v221
    %v717 = vunpack.c.l.b16 %v222
    %v718 = vunpack.c.l.b16 %v223
    %v719 = vunpack.c.h.b16 %v223
    %v720 = vunpack.c.l.b16 %v224
    %v721 = vunpack.c.l.b16 %v225
    %v722 = vunpack.c.h.b16 %v225
    %v723 = vunpack.c.l.b16 %v226
    %v724 = vunpack.c.l.b16 %v227
    %v725 = vunpack.c.h.b16 %v227
    %v726 = vunpack.c.l.b16 %v228
    %v727 = vunpack.c.l.b16 %v229
    %v728 = vunpack.c.h.b16 %v229
    %v729 = vunpack.c.l.b16 %v230
    %v730 = vunpack.c.l.b16 %v231
    %v731 = vunpack.c.h.b16 %v231
    %v732 = vunpack.c.l.b16 %v232
    %v733 = vunpack.c.l.b16 %v233
    %v734 = vunpack.c.h.b16 %v233
    %v735 = vunpack.c.l.b16 %v234
    %v736 = vunpack.c.l.b16 %v235
    %v737 = vunpack.c.h.b16 %v235
    %v738 = vunpack.c.l.b16 %v236
    %v739 = vunpack.c.l.b16 %v237
    %v740 = vunpack.c.h.b16 %v237
    %v741 = vunpack.c.l.b16 %v238
    %v742 = vunpack.c.l.b16 %v239
    %v743 = vunpack.c.h.b16 %v239
    %v744 = vunpack.c.l.b16 %v240
    %v745 = vunpack.c.l.b16 %v241
    %v746 = vunpack.c.h.b16 %v241
    %v747 = vunpack.c.l.b16 %v242
    %v748 = vunpack.c.l.b16 %v243
    %v749 = vunpack.c.h.b16 %v243
    %v750 = vunpack.c.l.b16 %v244
    %v751 = vunpack.c.l.b16 %v245
    %v752 = vunpack.c.h.b16 %v245
    %v753 = vunpack.c.l.b16 %v246
    %v754 = vunpack.c.l.b16 %v247
    %v755 = vunpack.c.h.b16 %v247
    %v756 = vunpack.c.l.b16 %v248
    %v757 = vunpack.c.l.b16 %v249
    %v758 = vunpack.c.h.b16 %v249
    %v759 = vunpack.c.l.b16 %v250
    %v760 = vunpack.c.l.b16 %v251
    %v761 = vunpack.c.h.b16 %v251
    %v762 = vunpack.c.l.b16 %v252
    %v763 = vunpack.c.l.b16 %v253
    %v764 = vunpack.c.h.b16 %v253
    %v765 = vunpack.c.l.b16 %v254
    %v766 = vunpack.c.l.b16 %v255
    %v767 = vunpack.c.h.b16 %v255
    %v768 = vunpack.c.l.b16 %v256
    %v769 = vunpack.c.l.b16 %v257
    %v770 = vunpack.c.h.b16 %v257
    %v771 = vunpack.c.l.b16 %v258
    %v772 = vunpack.c.l.b16 %v259
    %v773 = vunpack.c.h.b16 %v259
    %v774 = vunpack.c.l.b16 %v260
    %v775 = vunpack.c.l.b16 %v261
    %v776 = vunpack.c.h.b16 %v261
    %v777 = vunpack.c.l.b16 %v262
    %v778 = vunpack.c.l.b16 %v263
    %v779 = vunpack.c.h.b16 %v263
    %v780 = vunpack.c.l.b16 %v264
    %v781 = vunpack.c.l.b16 %v265
    %v782 = vunpack.c.h.b16 %v265
    %v783 = vunpack.c.l.b16 %v266
    %v784 = vunpack.c.l.b16 %v267
    %v785 = vunpack.c.h.b16 %v267
    %v786 = vunpack.c.l.b16 %v268
    %v787 = vunpack.c.l.b16 %v269
    %v788 = vunpack.c.h.b16 %v269
    %v789 = vunpack.c.l.b16 %v270
    %v790 = vunpack.c.l.b16 %v271
    %v791 = vunpack.c.h.b16 %v271
    %v792 = vunpack.c.l.b16 %v272
    %v793 = vunpack.c.l.b16 %v273
    %v794 = vunpack.c.h.b16 %v273
    %v795 = vunpack.c.l.b16 %v274
    %v796 = vunpack.c.l.b16 %v275
    %v797 = vunpack.c.h.b16 %v275
    %v798 = vunpack.c.l.b16 %v276
    %v799 = vpack.c.b16 %v499, %v496
    %v800 = vpack.c.b16 %v500, %v497
    %v801 = vpack.c.b16 %v501, %v498
    %v802 = vpack.c.b16 %v505, %v502
    %v803 = vpack.c.b16 %v506, %v503
    %v804 = vpack.c.b16 %v507, %v504
    %v805 = vpack.c.b16 %v511, %v508
    %v806 = vpack.c.b16 %v512, %v509
    %v807 = vpack.c.b16 %v513, %v510
    %v808 = vpack.c.b16 %v517, %v514
    %v809 = vpack.c.b16 %v518, %v515
    %v810 = vpack.c.b16 %v519, %v516
    %v811 = vpack.c.b16 %v523, %v520
    %v812 = vpack.c.b16 %v524, %v521
    %v813 = vpack.c.b16 %v525, %v522
    %v814 = vpack.c.b16 %v529, %v526
    %v815 = vpack.c.b16 %v530, %v527
    %v816 = vpack.c.b16 %v531, %v528
    %v817 = vpack.c.b16 %v535, %v532
    %v818 = vpack.c.b16 %v536, %v533
    %v819 = vpack.c.b16 %v537, %v534
    %v820 = vpack.c.b16 %v541, %v538
    %v821 = vpack.c.b16 %v542, %v539
    %v822 = vpack.c.b16 %v543, %v540
    %v823 = vpack.c.b16 %v547, %v544
    %v824 = vpack.c.b16 %v548, %v545
    %v825 = vpack.c.b16 %v549, %v546
    %v826 = vpack.c.b16 %v553, %v550
    %v827 = vpack.c.b16 %v554, %v551
    %v828 = vpack.c.b16 %v555, %v552
    %v829 = vpack.c.b16 %v559, %v556
    %v830 = vpack.c.b16 %v560, %v557
    %v831 = vpack.c.b16 %v561, %v558
    %v832 = vpack.c.b16 %v565, %v562
    %v833 = vpack.c.b16 %v566, %v563
    %v834 = vpack.c.b16 %v567, %v564
    %v835 = vpack.c.b16 %v571, %v568
    %v836 = vpack.c.b16 %v572, %v569
    %v837 = vpack.c.b16 %v573, %v570
    %v838 = vpack.c.b16 %v577, %v574
    %v839 = vpack.c.b16 %v578, %v575
    %v840 = vpack.c.b16 %v579, %v576
    %v841 = vpack.c.b16 %v583, %v580
    %v842 = vpack.c.b16 %v584, %v581
    %v843 = vpack.c.b16 %v585, %v582
    %v844 = vpack.c.b16 %v589, %v586
    %v845 = vpack.c.b16 %v590, %v587
    %v846 = vpack.c.b16 %v591, %v588
    %v847 = vpack.c.b16 %v595, %v592
    %v848 = vpack.c.b16 %v596, %v593
    %v849 = vpack.c.b16 %v597, %v594
    %v850 = vpack.c.b16 %v601, %v598
    %v851 = vpack.c.b16 %v602, %v599
    %v852 = vpack.c.b16 %v603, %v600
    %v853 = vpack.c.b16 %v607, %v604
    %v854 = vpack.c.b16 %v608, %v605
    %v855 = vpack.c.b16 %v609, %v606
    %v856 = vpack.c.b16 %v613, %v610
    %v857 = vpack.c.b16 %v614, %v611
    %v858 = vpack.c.b16 %v615, %v612
    %v859 = vpack.c.b16 %v619, %v616
    %v860 = vpack.c.b16 %v620, %v617
    %v861 = vpack.c.b16 %v621, %v618
    %v862 = vpack.c.b16 %v625, %v622
    %v863 = vpack.c.b16 %v626, %v623
    %v864 = vpack.c.b16 %v627, %v624
    %v865 = vpack.c.b16 %v631, %v628
    %v866 = vpack.c.b16 %v632, %v629
    %v867 = vpack.c.b16 %v633, %v630
    %v868 = vpack.c.b16 %v637, %v634
    %v869 = vpack.c.b16 %v638, %v635
    %v870 = vpack.c.b16 %v639, %v636
    %v871 = vpack.c.b16 %v643, %v640
    %v872 = vpack.c.b16 %v644, %v641
    %v873 = vpack.c.b16 %v645, %v642
    %v874 = vpack.c.b16 %v649, %v646
    %v875 = vpack.c.b16 %v650, %v647
    %v876 = vpack.c.b16 %v651, %v648
    %v877 = vpack.c.b16 %v655, %v652
    %v878 = vpack.c.b16 %v656, %v653
    %v879 = vpack.c.b16 %v657, %v654
    %v880 = vpack.c.b16 %v661, %v658
    %v881 = vpack.c.b16 %v662, %v659
    %v882 = vpack.c.b16 %v663, %v660
    %v883 = vpack.c.b16 %v667, %v664
    %v884 = vpack.c.b16 %v668, %v665
    %v885 = vpack.c.b16 %v669, %v666
    %v886 = vpack.c.b16 %v673, %v670
    %v887 = vpack.c.b16 %v674, %v671
    %v888 = vpack.c.b16 %v675, %v672
    %v889 = vpack.c.b16 %v679, %v676
    %v890 = vpack.c.b16 %v680, %v677
    %v891 = vpack.c.b16 %v681, %v678
    %v892 = vpack.c.b16 %v685, %v682
    %v893 = vpack.c.b16 %v686, %v683
    %v894 = vpack.c.b16 %v687, %v684
    %v895 = vpack.c.b16 %v691, %v688
    %v896 = vpack.c.b16 %v692, %v689
    %v897 = vpack.c.b16 %v693, %v690
    %v898 = vpack.c.b16 %v697, %v694
    %v899 = vpack.c.b16 %v698, %v695
    %v900 = vpack.c.b16 %v699, %v696
    %v901 = vpack.c.b16 %v703, %v700
    %v902 = vpack.c.b16 %v704, %v701
    %v903 = vpack.c.b16 %v705, %v702
    %v904 = vpack.c.b16 %v709, %v706
    %v905 = vpack.c.b16 %v710, %v707
    %v906 = vpack.c.b16 %v711, %v708
    %v907 = vpack.c.b16 %v715, %v712
    %v908 = vpack.c.b16 %v716, %v713
    %v909 = vpack.c.b16 %v717, %v714
    %v910 = vpack.c.b16 %v721, %v718
    %v911 = vpack.c.b16 %v722, %v719
    %v912 = vpack.c.b16 %v723, %v720
    %v913 = vpack.c.b16 %v727, %v724
    %v914 = vpack.c.b16 %v728, %v725
    %v915 = vpack.c.b16 %v729, %v726
    %v916 = vpack.c.b16 %v733, %v730
    %v917 = vpack.c.b16 %v734, %v731
    %v918 = vpack.c.b16 %v735, %v732
    %v919 = vpack.c.b16 %v739, %v736
    %v920 = vpack.c.b16 %v740, %v737
    %v921 = vpack.c.b16 %v741, %v738
    %v922 = vpack.c.b16 %v745, %v742
    %v923 = vpack.c.b16 %v746, %v743
    %v924 = vpack.c.b16 %v747, %v744
    %v925 = vpack.c.b16 %v751, %v748
    %v926 = vpack.c.b16 %v752, %v749
    %v927 = vpack.c.b16 %v753, %v750
    %v928 = vpack.c.b16 %v757, %v754
    %v929 = vpack.c.b16 %v758, %v755
    %v930 = vpack.c.b16 %v759, %v756
    %v931 = vpack.c.b16 %v763, %v760
    %v932 = vpack.c.b16 %v764, %v761
    %v933 = vpack.c.b16 %v765, %v762
    %v934 = vpack.c.b16 %v769, %v766
    %v935 = vpack.c.b16 %v770, %v767
    %v936 = vpack.c.b16 %v771, %v768
    %v937 = vpack.c.b16 %v775, %v772
    %v938 = vpack.c.b16 %v776, %v773
    %v939 = vpack.c.b16 %v777, %v774
    %v940 = vpack.c.b16 %v781, %v778
    %v941 = vpack.c.b16 %v782, %v779
    %v942 = vpack.c.b16 %v783, %v780
    %v943 = vpack.c.b16 %v787, %v784
    %v944 = vpack.c.b16 %v788, %v785
    %v945 = vpack.c.b16 %v789, %v786
    %v946 = vpack.c.b16 %v793, %v790
    %v947 = vpack.c.b16 %v794, %v791
    %v948 = vpack.c.b16 %v795, %v792
    %v949 = vpack.c.b16 %v796, %v796
    %v950 = vpack.c.b16 %v797, %v797
    %v951 = vpack.c.b16 %v798, %v798
    %vm1102 = vcmask 293888
    %v1104 = vsel %vm1102, %v74, 0
    %vm1106 = vcmask 1041408
    %v1108 = vsel %vm1106, %v949, 0
    %v1111 = vsel %vm1106, %v950, 0
    %v1114 = vsel %vm1106, %v951, 0
    %1116 = vmatprep.subr.bf16.mxu0 %v800
    %1117 = vmatpush1.bf16.msra.mxu0 %v799
    %1118 = vmatprep.subr.bf16.mxu0 %v803
    %1119 = vmatpush1.bf16.msra.mxu0 %v802
    %1120 = vmatprep.subr.bf16.mxu0 %v806
    %1121 = vmatpush1.bf16.msra.mxu0 %v805
    %1122 = vmatprep.subr.bf16.mxu0 %v809
    %1123 = vmatpush1.bf16.msra.mxu0 %v808
    %1124 = vmatprep.subr.bf16.mxu0 %v812
    %1125 = vmatpush1.bf16.msra.mxu0 %v811
    %1126 = vmatprep.subr.bf16.mxu0 %v815
    %1127 = vmatpush1.bf16.msra.mxu0 %v814
    %1128 = vmatprep.subr.bf16.mxu0 %v818
    %1129 = vmatpush1.bf16.msra.mxu0 %v817
    %1130 = vmatprep.subr.bf16.mxu0 %v821
    %1131 = vmatpush1.bf16.msra.mxu0 %v820
    %1132 = vmatprep.subr.bf16.mxu0 %v824
    %1133 = vmatpush1.bf16.msra.mxu0 %v823
    %1134 = vmatprep.subr.bf16.mxu0 %v827
    %1135 = vmatpush1.bf16.msra.mxu0 %v826
    %1136 = vmatprep.subr.bf16.mxu0 %v830
    %1137 = vmatpush1.bf16.msra.mxu0 %v829
    %1138 = vmatprep.subr.bf16.mxu0 %v833
    %1139 = vmatpush1.bf16.msra.mxu0 %v832
    %1140 = vmatprep.subr.bf16.mxu0 %v836
    %1141 = vmatpush1.bf16.msra.mxu0 %v835
    %1142 = vmatprep.subr.bf16.mxu0 %v839
    %1143 = vmatpush1.bf16.msra.mxu0 %v838
    %1144 = vmatprep.subr.bf16.mxu0 %v842
    %1145 = vmatpush1.bf16.msra.mxu0 %v841
    %1146 = vmatprep.subr.bf16.mxu0 %v845
    %1147 = vmatpush1.bf16.msra.mxu0 %v844
    %1148 = vmatprep.mubr.bf16.mxu0 %v69
    %1149 = vmatmul.mubr.bf16.gmra.mrb[0].mxu0 %v68
    %v1150 = vpop.f32.mrb[0].mxu0
    %v1151 = vadd.f32 %v282, %v1150
    %v1152 = vpop.f32.mrb[0].mxu0
    %v1153 = vadd.f32 %v286, %v1152
    %v1154 = vpop.f32.mrb[0].mxu0
    %v1155 = vpop.f32.mrb[0].mxu0
    %1156 = vdwg.mxu0
    %1157 = vmatprep.subr.bf16.mxu0 %v848
    %1158 = vmatpush1.bf16.msra.mxu0 %v847
    %1159 = vmatprep.subr.bf16.mxu0 %v851
    %1160 = vmatpush1.bf16.msra.mxu0 %v850
    %1161 = vmatprep.subr.bf16.mxu0 %v854
    %1162 = vmatpush1.bf16.msra.mxu0 %v853
    %1163 = vmatprep.subr.bf16.mxu0 %v857
    %1164 = vmatpush1.bf16.msra.mxu0 %v856
    %1165 = vmatprep.subr.bf16.mxu0 %v860
    %1166 = vmatpush1.bf16.msra.mxu0 %v859
    %1167 = vmatprep.subr.bf16.mxu0 %v863
    %1168 = vmatpush1.bf16.msra.mxu0 %v862
    %1169 = vmatprep.subr.bf16.mxu0 %v866
    %1170 = vmatpush1.bf16.msra.mxu0 %v865
    %1171 = vmatprep.subr.bf16.mxu0 %v869
    %1172 = vmatpush1.bf16.msra.mxu0 %v868
    %1173 = vmatprep.subr.bf16.mxu0 %v872
    %1174 = vmatpush1.bf16.msra.mxu0 %v871
    %1175 = vmatprep.subr.bf16.mxu0 %v875
    %1176 = vmatpush1.bf16.msra.mxu0 %v874
    %1177 = vmatprep.subr.bf16.mxu0 %v878
    %1178 = vmatpush1.bf16.msra.mxu0 %v877
    %1179 = vmatprep.subr.bf16.mxu0 %v881
    %1180 = vmatpush1.bf16.msra.mxu0 %v880
    %1181 = vmatprep.subr.bf16.mxu0 %v884
    %1182 = vmatpush1.bf16.msra.mxu0 %v883
    %1183 = vmatprep.subr.bf16.mxu0 %v887
    %1184 = vmatpush1.bf16.msra.mxu0 %v886
    %1185 = vmatprep.subr.bf16.mxu0 %v890
    %1186 = vmatpush1.bf16.msra.mxu0 %v889
    %1187 = vmatprep.subr.bf16.mxu0 %v893
    %1188 = vmatpush1.bf16.msra.mxu0 %v892
    %1189 = vmatprep.mubr.bf16.mxu0 %v71
    %1190 = vmatmul.mubr.bf16.gmra.mrb[0].mxu0 %v70
    %v1191 = vpop.f32.mrb[0].mxu0
    %v1192 = vadd.f32 %v1151, %v1191
    %v1193 = vpop.f32.mrb[0].mxu0
    %v1194 = vadd.f32 %v1153, %v1193
    %v1195 = vpop.f32.mrb[0].mxu0
    %v1196 = vpop.f32.mrb[0].mxu0
    %1197 = vdwg.mxu0
    %1198 = vmatprep.subr.bf16.mxu0 %v896
    %1199 = vmatpush1.bf16.msra.mxu0 %v895
    %1200 = vmatprep.subr.bf16.mxu0 %v899
    %1201 = vmatpush1.bf16.msra.mxu0 %v898
    %1202 = vmatprep.subr.bf16.mxu0 %v902
    %1203 = vmatpush1.bf16.msra.mxu0 %v901
    %1204 = vmatprep.subr.bf16.mxu0 %v905
    %1205 = vmatpush1.bf16.msra.mxu0 %v904
    %1206 = vmatprep.subr.bf16.mxu0 %v908
    %1207 = vmatpush1.bf16.msra.mxu0 %v907
    %1208 = vmatprep.subr.bf16.mxu0 %v911
    %1209 = vmatpush1.bf16.msra.mxu0 %v910
    %1210 = vmatprep.subr.bf16.mxu0 %v914
    %1211 = vmatpush1.bf16.msra.mxu0 %v913
    %1212 = vmatprep.subr.bf16.mxu0 %v917
    %1213 = vmatpush1.bf16.msra.mxu0 %v916
    %1214 = vmatprep.subr.bf16.mxu0 %v920
    %1215 = vmatpush1.bf16.msra.mxu0 %v919
    %1216 = vmatprep.subr.bf16.mxu0 %v923
    %1217 = vmatpush1.bf16.msra.mxu0 %v922
    %1218 = vmatprep.subr.bf16.mxu0 %v926
    %1219 = vmatpush1.bf16.msra.mxu0 %v925
    %1220 = vmatprep.subr.bf16.mxu0 %v929
    %1221 = vmatpush1.bf16.msra.mxu0 %v928
    %1222 = vmatprep.subr.bf16.mxu0 %v932
    %1223 = vmatpush1.bf16.msra.mxu0 %v931
    %1224 = vmatprep.subr.bf16.mxu0 %v935
    %1225 = vmatpush1.bf16.msra.mxu0 %v934
    %1226 = vmatprep.subr.bf16.mxu0 %v938
    %1227 = vmatpush1.bf16.msra.mxu0 %v937
    %1228 = vmatprep.subr.bf16.mxu0 %v941
    %1229 = vmatpush1.bf16.msra.mxu0 %v940
    %1230 = vmatprep.mubr.bf16.mxu0 %v73
    %1231 = vmatmul.mubr.bf16.gmra.mrb[0].mxu0 %v72
    %v1232 = vpop.f32.mrb[0].mxu0
    %v1233 = vadd.f32 %v1192, %v1232
    %v1234 = vpop.f32.mrb[0].mxu0
    %v1235 = vadd.f32 %v1194, %v1234
    %v1236 = vpop.f32.mrb[0].mxu0
    %v1237 = vpop.f32.mrb[0].mxu0
    %1238 = vdwg.mxu0
    %1239 = vmatprep.subr.bf16.mxu0 %v944
    %1240 = vmatpush1.bf16.msra.mxu0 %v943
    %1241 = vmatprep.subr.bf16.mxu0 %v947
    %1242 = vmatpush1.bf16.msra.mxu0 %v946
    %1243 = vmatprep.subr.bf16.mxu0 %v1111
    %1244 = vmatpush1.bf16.msra.mxu0 %v1108
    %1245 = vmatprep.subr.bf16.mxu0 0
    %1246 = vmatpush1.bf16.msra.mxu0 0
    %1247 = vmatprep.subr.bf16.mxu0 0
    %1248 = vmatpush1.bf16.msra.mxu0 0
    %1249 = vmatprep.subr.bf16.mxu0 0
    %1250 = vmatpush1.bf16.msra.mxu0 0
    %1251 = vmatprep.subr.bf16.mxu0 0
    %1252 = vmatpush1.bf16.msra.mxu0 0
    %1253 = vmatprep.subr.bf16.mxu0 0
    %1254 = vmatpush1.bf16.msra.mxu0 0
    %1255 = vmatprep.subr.bf16.mxu0 0
    %1256 = vmatpush1.bf16.msra.mxu0 0
    %1257 = vmatprep.subr.bf16.mxu0 0
    %1258 = vmatpush1.bf16.msra.mxu0 0
    %1259 = vmatprep.subr.bf16.mxu0 0
    %1260 = vmatpush1.bf16.msra.mxu0 0
    %1261 = vmatprep.subr.bf16.mxu0 0
    %1262 = vmatpush1.bf16.msra.mxu0 0
    %1263 = vmatprep.subr.bf16.mxu0 0
    %1264 = vmatpush1.bf16.msra.mxu0 0
    %1265 = vmatprep.subr.bf16.mxu0 0
    %1266 = vmatpush1.bf16.msra.mxu0 0
    %1267 = vmatprep.subr.bf16.mxu0 0
    %1268 = vmatpush1.bf16.msra.mxu0 0
    %1269 = vmatprep.subr.bf16.mxu0 0
    %1270 = vmatpush1.bf16.msra.mxu0 0
    %1271 = vmatprep.mubr.bf16.mxu0 0
    %1272 = vmatmul.mubr.bf16.gmra.mrb[0].mxu0 %v1104
    %v1273 = vpop.f32.mrb[0].mxu0
    %v1274 = vadd.f32 %v1233, %v1273
    %v1275 = vpop.f32.mrb[0].mxu0
    %v1276 = vadd.f32 %v1235, %v1275
    %v1277 = vpop.f32.mrb[0].mxu0
    %v1278 = vpop.f32.mrb[0].mxu0
    %1279 = vdwg.mxu0
    %1280 = vmatprep.subr.bf16.mxu0 0
    %1281 = vmatpush1.bf16.msra.mxu0 %v801
    %1282 = vmatprep.subr.bf16.mxu0 0
    %1283 = vmatpush1.bf16.msra.mxu0 %v804
    %1284 = vmatprep.subr.bf16.mxu0 0
    %1285 = vmatpush1.bf16.msra.mxu0 %v807
    %1286 = vmatprep.subr.bf16.mxu0 0
    %1287 = vmatpush1.bf16.msra.mxu0 %v810
    %1288 = vmatprep.subr.bf16.mxu0 0
    %1289 = vmatpush1.bf16.msra.mxu0 %v813
    %1290 = vmatprep.subr.bf16.mxu0 0
    %1291 = vmatpush1.bf16.msra.mxu0 %v816
    %1292 = vmatprep.subr.bf16.mxu0 0
    %1293 = vmatpush1.bf16.msra.mxu0 %v819
    %1294 = vmatprep.subr.bf16.mxu0 0
    %1295 = vmatpush1.bf16.msra.mxu0 %v822
    %1296 = vmatprep.subr.bf16.mxu0 0
    %1297 = vmatpush1.bf16.msra.mxu0 %v825
    %1298 = vmatprep.subr.bf16.mxu0 0
    %1299 = vmatpush1.bf16.msra.mxu0 %v828
    %1300 = vmatprep.subr.bf16.mxu0 0
    %1301 = vmatpush1.bf16.msra.mxu0 %v831
    %1302 = vmatprep.subr.bf16.mxu0 0
    %1303 = vmatpush1.bf16.msra.mxu0 %v834
    %1304 = vmatprep.subr.bf16.mxu0 0
    %1305 = vmatpush1.bf16.msra.mxu0 %v837
    %1306 = vmatprep.subr.bf16.mxu0 0
    %1307 = vmatpush1.bf16.msra.mxu0 %v840
    %1308 = vmatprep.subr.bf16.mxu0 0
    %1309 = vmatpush1.bf16.msra.mxu0 %v843
    %1310 = vmatprep.subr.bf16.mxu0 0
    %1311 = vmatpush1.bf16.msra.mxu0 %v846
    %1312 = vmatprep.mubr.bf16.mxu0 %v69
    %1313 = vmatmul.mubr.bf16.gmra.mrb[0].mxu0 %v68
    %v1314 = vpop.f32.mrb[0].mxu0
    %v1315 = vadd.f32 %v290, %v1314
    %v1316 = vpop.f32.mrb[0].mxu0
    %v1317 = vpop.f32.mrb[0].mxu0
    %v1318 = vpop.f32.mrb[0].mxu0
    %1319 = vdwg.mxu0
    %1320 = vmatprep.subr.bf16.mxu0 0
    %1321 = vmatpush1.bf16.msra.mxu0 %v849
    %1322 = vmatprep.subr.bf16.mxu0 0
    %1323 = vmatpush1.bf16.msra.mxu0 %v852
    %1324 = vmatprep.subr.bf16.mxu0 0
    %1325 = vmatpush1.bf16.msra.mxu0 %v855
    %1326 = vmatprep.subr.bf16.mxu0 0
    %1327 = vmatpush1.bf16.msra.mxu0 %v858
    %1328 = vmatprep.subr.bf16.mxu0 0
    %1329 = vmatpush1.bf16.msra.mxu0 %v861
    %1330 = vmatprep.subr.bf16.mxu0 0
    %1331 = vmatpush1.bf16.msra.mxu0 %v864
    %1332 = vmatprep.subr.bf16.mxu0 0
    %1333 = vmatpush1.bf16.msra.mxu0 %v867
    %1334 = vmatprep.subr.bf16.mxu0 0
    %1335 = vmatpush1.bf16.msra.mxu0 %v870
    %1336 = vmatprep.subr.bf16.mxu0 0
    %1337 = vmatpush1.bf16.msra.mxu0 %v873
    %1338 = vmatprep.subr.bf16.mxu0 0
    %1339 = vmatpush1.bf16.msra.mxu0 %v876
    %1340 = vmatprep.subr.bf16.mxu0 0
    %1341 = vmatpush1.bf16.msra.mxu0 %v879
    %1342 = vmatprep.subr.bf16.mxu0 0
    %1343 = vmatpush1.bf16.msra.mxu0 %v882
    %1344 = vmatprep.subr.bf16.mxu0 0
    %1345 = vmatpush1.bf16.msra.mxu0 %v885
    %1346 = vmatprep.subr.bf16.mxu0 0
    %1347 = vmatpush1.bf16.msra.mxu0 %v888
    %1348 = vmatprep.subr.bf16.mxu0 0
    %1349 = vmatpush1.bf16.msra.mxu0 %v891
    %1350 = vmatprep.subr.bf16.mxu0 0
    %1351 = vmatpush1.bf16.msra.mxu0 %v894
    %1352 = vmatprep.mubr.bf16.mxu0 %v71
    %1353 = vmatmul.mubr.bf16.gmra.mrb[0].mxu0 %v70
    %v1354 = vpop.f32.mrb[0].mxu0
    %v1355 = vadd.f32 %v1315, %v1354
    %v1356 = vpop.f32.mrb[0].mxu0
    %v1357 = vpop.f32.mrb[0].mxu0
    %v1358 = vpop.f32.mrb[0].mxu0
    %1359 = vdwg.mxu0
    %1360 = vmatprep.subr.bf16.mxu0 0
    %1361 = vmatpush1.bf16.msra.mxu0 %v897
    %1362 = vmatprep.subr.bf16.mxu0 0
    %1363 = vmatpush1.bf16.msra.mxu0 %v900
    %1364 = vmatprep.subr.bf16.mxu0 0
    %1365 = vmatpush1.bf16.msra.mxu0 %v903
    %1366 = vmatprep.subr.bf16.mxu0 0
    %1367 = vmatpush1.bf16.msra.mxu0 %v906
    %1368 = vmatprep.subr.bf16.mxu0 0
    %1369 = vmatpush1.bf16.msra.mxu0 %v909
    %1370 = vmatprep.subr.bf16.mxu0 0
    %1371 = vmatpush1.bf16.msra.mxu0 %v912
    %1372 = vmatprep.subr.bf16.mxu0 0
    %1373 = vmatpush1.bf16.msra.mxu0 %v915
    %1374 = vmatprep.subr.bf16.mxu0 0
    %1375 = vmatpush1.bf16.msra.mxu0 %v918
    %1376 = vmatprep.subr.bf16.mxu0 0
    %1377 = vmatpush1.bf16.msra.mxu0 %v921
    %1378 = vmatprep.subr.bf16.mxu0 0
    %1379 = vmatpush1.bf16.msra.mxu0 %v924
    %1380 = vmatprep.subr.bf16.mxu0 0
    %1381 = vmatpush1.bf16.msra.mxu0 %v927
    %1382 = vmatprep.subr.bf16.mxu0 0
    %1383 = vmatpush1.bf16.msra.mxu0 %v930
    %1384 = vmatprep.subr.bf16.mxu0 0
    %1385 = vmatpush1.bf16.msra.mxu0 %v933
    %1386 = vmatprep.subr.bf16.mxu0 0
    %1387 = vmatpush1.bf16.msra.mxu0 %v936
    %1388 = vmatprep.subr.bf16.mxu0 0
    %1389 = vmatpush1.bf16.msra.mxu0 %v939
    %1390 = vmatprep.subr.bf16.mxu0 0
    %1391 = vmatpush1.bf16.msra.mxu0 %v942
    %1392 = vmatprep.mubr.bf16.mxu0 %v73
    %1393 = vmatmul.mubr.bf16.gmra.mrb[0].mxu0 %v72
    %v1394 = vpop.f32.mrb[0].mxu0
    %v1395 = vadd.f32 %v1355, %v1394
    %v1396 = vpop.f32.mrb[0].mxu0
    %v1397 = vpop.f32.mrb[0].mxu0
    %v1398 = vpop.f32.mrb[0].mxu0
    %1399 = vdwg.mxu0
    %1400 = vmatprep.subr.bf16.mxu0 0
    %1401 = vmatpush1.bf16.msra.mxu0 %v945
    %1402 = vmatprep.subr.bf16.mxu0 0
    %1403 = vmatpush1.bf16.msra.mxu0 %v948
    %1404 = vmatprep.subr.bf16.mxu0 0
    %1405 = vmatpush1.bf16.msra.mxu0 %v1114
    %1406 = vmatprep.subr.bf16.mxu0 0
    %1407 = vmatpush1.bf16.msra.mxu0 0
    %1408 = vmatprep.subr.bf16.mxu0 0
    %1409 = vmatpush1.bf16.msra.mxu0 0
    %1410 = vmatprep.subr.bf16.mxu0 0
    %1411 = vmatpush1.bf16.msra.mxu0 0
    %1412 = vmatprep.subr.bf16.mxu0 0
    %1413 = vmatpush1.bf16.msra.mxu0 0
    %1414 = vmatprep.subr.bf16.mxu0 0
    %1415 = vmatpush1.bf16.msra.mxu0 0
    %1416 = vmatprep.subr.bf16.mxu0 0
    %1417 = vmatpush1.bf16.msra.mxu0 0
    %1418 = vmatprep.subr.bf16.mxu0 0
    %1419 = vmatpush1.bf16.msra.mxu0 0
    %1420 = vmatprep.subr.bf16.mxu0 0
    %1421 = vmatpush1.bf16.msra.mxu0 0
    %1422 = vmatprep.subr.bf16.mxu0 0
    %1423 = vmatpush1.bf16.msra.mxu0 0
    %1424 = vmatprep.subr.bf16.mxu0 0
    %1425 = vmatpush1.bf16.msra.mxu0 0
    %1426 = vmatprep.subr.bf16.mxu0 0
    %1427 = vmatpush1.bf16.msra.mxu0 0
    %1428 = vmatprep.subr.bf16.mxu0 0
    %1429 = vmatpush1.bf16.msra.mxu0 0
    %1430 = vmatprep.subr.bf16.mxu0 0
    %1431 = vmatpush1.bf16.msra.mxu0 0
    %1432 = vmatprep.mubr.bf16.mxu0 0
    %1433 = vmatmul.mubr.bf16.gmra.mrb[0].mxu0 %v1104
    %v1434 = vpop.f32.mrb[0].mxu0
    %v1435 = vadd.f32 %v1395, %v1434
    %v1436 = vpop.f32.mrb[0].mxu0
    %v1437 = vpop.f32.mrb[0].mxu0
    %v1438 = vpop.f32.mrb[0].mxu0
    %1439 = vdwg.mxu0
    %v1440 = vmax.f32 %v1274, 0.0
    %v1441 = vmax.f32 %v1276, 0.0
    %v1442 = vmax.f32 %v1435, 0.0
    %v1443 = vand.u32 2147483647, %v1274
    %v1444 = vand.u32 2147483647, %v1276
    %v1445 = vand.u32 2147483647, %v1435
    %v1446 = vsub.f32 0.0, %v1443
    %v1447 = vsub.f32 0.0, %v1444
    %v1448 = vsub.f32 0.0, %v1445
    %v1449 = vmul.f32 %v1446, 1.442695
    %v1450 = vpow.pop %v1449
    %v1451 = vmul.f32 %v1447, 1.442695
    %v1452 = vpow.pop %v1451
    %v1453 = vmul.f32 %v1448, 1.442695
    %v1454 = vpow.pop %v1453
    %v1455 = vadd.f32 %v1450, 1.0
    %v1456 = vlog2.pop %v1455
    %v1457 = vmul.f32 %v1456, 0.6931472
    %v1458 = vmul.f32 -0.5, %v1450
    %v1459 = vadd.f32 %v1458, 1.0
    %v1460 = vmul.f32 %v1459, %v1450
    %v1461 = vand.u32 2147483647, %v1450
    %vm1462 = vcmp.lt.f32.partialorder %v1461, 0.0004427343
    %v1463 = vsel %vm1462, %v1460, %v1457
    %v1464 = vadd.f32 %v1452, 1.0
    %v1465 = vlog2.pop %v1464
    %v1466 = vmul.f32 %v1465, 0.6931472
    %v1467 = vmul.f32 -0.5, %v1452
    %v1468 = vadd.f32 %v1467, 1.0
    %v1469 = vmul.f32 %v1468, %v1452
    %v1470 = vand.u32 2147483647, %v1452
    %vm1471 = vcmp.lt.f32.partialorder %v1470, 0.0004427343
    %v1472 = vsel %vm1471, %v1469, %v1466
    %v1473 = vadd.f32 %v1454, 1.0
    %v1474 = vlog2.pop %v1473
    %v1475 = vmul.f32 %v1474, 0.6931472
    %v1476 = vmul.f32 -0.5, %v1454
    %v1477 = vadd.f32 %v1476, 1.0
    %v1478 = vmul.f32 %v1477, %v1454
    %v1479 = vand.u32 2147483647, %v1454
    %vm1480 = vcmp.lt.f32.partialorder %v1479, 0.0004427343
    %v1481 = vsel %vm1480, %v1478, %v1475
    %v1482 = vadd.f32 %v1440, %v1463
    %v1483 = vadd.f32 %v1441, %v1472
    %v1484 = vadd.f32 %v1442, %v1481
    %v1485 = vpack.c.bf16 %v1482, %v1482
    %v1486 = vpack.c.bf16 %v1483, %v1483
    %v1487 = vpack.c.bf16 %v1484, %v1484
    %v1488 = vld [vmem:[#allocation7] sm:$0xf]
    %v1489 = vld [vmem:[#allocation7 + $0x4] sm:$0xf]
    %v1490 = vld [vmem:[#allocation7 + $0x8] sm:$0xf]
    %v1491 = vld [vmem:[#allocation7 + $0xc] sm:$0xf]
    %v1492 = vld [vmem:[#allocation7 + $0x10] sm:$0xf]
    %v1493 = vld [vmem:[#allocation7 + $0x14] sm:$0xf]
    %v1494 = vld [vmem:[#allocation7 + $0x18] sm:$0xf]
    %v1495 = vld [vmem:[#allocation7 + $0x1c] sm:$0xf]
    %v1496 = vld [vmem:[#allocation7 + $0x20] sm:$0xf]
    %v1497 = vld [vmem:[#allocation7 + $0x24] sm:$0xf]
    %v1498 = vld [vmem:[#allocation7 + $0x28] sm:$0xf]
    %v1499 = vld [vmem:[#allocation7 + $0x2c] sm:$0xf]
    %v1500 = vld [vmem:[#allocation7 + $0x30] sm:$0xf]
    %v1501 = vld [vmem:[#allocation7 + $0x34] sm:$0xf]
    %v1502 = vld [vmem:[#allocation7 + $0x38] sm:$0xf]
    %v1503 = vld [vmem:[#allocation7 + $0x3c] sm:$0xf]
    %v1504 = vld [vmem:[#allocation7 + $0x40] sm:$0xf]
    %v1505 = vld [vmem:[#allocation7 + $0x44] sm:$0xf]
    %v1506 = vld [vmem:[#allocation7 + $0x48] sm:$0xf]
    %v1507 = vld [vmem:[#allocation7 + $0x4c] sm:$0xf]
    %v1508 = vld [vmem:[#allocation7 + $0x50] sm:$0xf]
    %v1509 = vld [vmem:[#allocation7 + $0x54] sm:$0xf]
    %v1510 = vld [vmem:[#allocation7 + $0x58] sm:$0xf]
    %v1511 = vld [vmem:[#allocation7 + $0x5c] sm:$0xf]
    %v1512 = vld [vmem:[#allocation7 + $0x60] sm:$0xf]
    %v1513 = vld [vmem:[#allocation7 + $0x64] sm:$0xf]
    %v1514 = vld [vmem:[#allocation7 + $0x68] sm:$0xf]
    %v1515 = vld [vmem:[#allocation7 + $0x6c] sm:$0xf]
    %v1516 = vld [vmem:[#allocation7 + $0x70] sm:$0xf]
    %v1517 = vld [vmem:[#allocation7 + $0x74] sm:$0xf]
    %v1518 = vld [vmem:[#allocation7 + $0x78] sm:$0xf]
    %v1519 = vld [vmem:[#allocation7 + $0x7c] sm:$0xf]
    %v1520 = vld [vmem:[#allocation7 + $0x80] sm:$0xf]
    %v1521 = vld [vmem:[#allocation7 + $0x84] sm:$0xf]
    %v1522 = vld [vmem:[#allocation7 + $0x88] sm:$0xf]
    %v1523 = vld [vmem:[#allocation7 + $0x8c] sm:$0xf]
    %v1524 = vld [vmem:[#allocation7 + $0x90] sm:$0xf]
    %v1525 = vld [vmem:[#allocation7 + $0x94] sm:$0xf]
    %v1526 = vld [vmem:[#allocation7 + $0x98] sm:$0xf]
    %v1527 = vld [vmem:[#allocation7 + $0x9c] sm:$0xf]
    %v1528 = vld [vmem:[#allocation7 + $0xa0] sm:$0xf]
    %v1529 = vld [vmem:[#allocation7 + $0xa4] sm:$0xf]
    %v1530 = vld [vmem:[#allocation7 + $0xa8] sm:$0xf]
    %v1531 = vld [vmem:[#allocation7 + $0xac] sm:$0xf]
    %v1532 = vld [vmem:[#allocation7 + $0xb0] sm:$0xf]
    %v1533 = vld [vmem:[#allocation7 + $0xb4] sm:$0xf]
    %v1534 = vld [vmem:[#allocation7 + $0xb8] sm:$0xf]
    %v1535 = vld [vmem:[#allocation7 + $0xbc] sm:$0xf]
    %v1536 = vld [vmem:[%s4] sm:$0x1]
    %v1538 = vlaneseq
    %v1539 = vshrl.u32 %v1538, 7
    %v1540 = vsub.s32 0, %v1539
    %v1541 = vrot.slane %v1536, %v1540
    %v1591 = vunpack.c.l.b16 %v1488
    %v1592 = vunpack.c.l.b16 %v1489
    %v1593 = vunpack.c.l.b16 %v1490
    %v1594 = vunpack.c.l.b16 %v1491
    %v1595 = vunpack.c.l.b16 %v1492
    %v1596 = vunpack.c.l.b16 %v1493
    %v1597 = vunpack.c.l.b16 %v1494
    %v1598 = vunpack.c.l.b16 %v1495
    %v1599 = vunpack.c.l.b16 %v1496
    %v1600 = vunpack.c.l.b16 %v1497
    %v1601 = vunpack.c.l.b16 %v1498
    %v1602 = vunpack.c.l.b16 %v1499
    %v1603 = vunpack.c.l.b16 %v1500
    %v1604 = vunpack.c.l.b16 %v1501
    %v1605 = vunpack.c.l.b16 %v1502
    %v1606 = vunpack.c.l.b16 %v1503
    %v1607 = vunpack.c.l.b16 %v1504
    %v1608 = vunpack.c.l.b16 %v1505
    %v1609 = vunpack.c.l.b16 %v1506
    %v1610 = vunpack.c.l.b16 %v1507
    %v1611 = vunpack.c.l.b16 %v1508
    %v1612 = vunpack.c.l.b16 %v1509
    %v1613 = vunpack.c.l.b16 %v1510
    %v1614 = vunpack.c.l.b16 %v1511
    %v1615 = vunpack.c.l.b16 %v1512
    %v1616 = vunpack.c.l.b16 %v1513
    %v1617 = vunpack.c.l.b16 %v1514
    %v1618 = vunpack.c.l.b16 %v1515
    %v1619 = vunpack.c.l.b16 %v1516
    %v1620 = vunpack.c.l.b16 %v1517
    %v1621 = vunpack.c.l.b16 %v1518
    %v1622 = vunpack.c.l.b16 %v1519
    %v1623 = vunpack.c.l.b16 %v1520
    %v1624 = vunpack.c.l.b16 %v1521
    %v1625 = vunpack.c.l.b16 %v1522
    %v1626 = vunpack.c.l.b16 %v1523
    %v1627 = vunpack.c.l.b16 %v1524
    %v1628 = vunpack.c.l.b16 %v1525
    %v1629 = vunpack.c.l.b16 %v1526
    %v1630 = vunpack.c.l.b16 %v1527
    %v1631 = vunpack.c.l.b16 %v1528
    %v1632 = vunpack.c.l.b16 %v1529
    %v1633 = vunpack.c.l.b16 %v1530
    %v1634 = vunpack.c.l.b16 %v1531
    %v1635 = vunpack.c.l.b16 %v1532
    %v1636 = vunpack.c.l.b16 %v1533
    %v1637 = vunpack.c.l.b16 %v1534
    %v1638 = vunpack.c.l.b16 %v1535
    %v1639 = vpack.c.b16 %v1592, %v1591
    %v1640 = vpack.c.b16 %v1594, %v1593
    %v1641 = vpack.c.b16 %v1596, %v1595
    %v1642 = vpack.c.b16 %v1598, %v1597
    %v1643 = vpack.c.b16 %v1600, %v1599
    %v1644 = vpack.c.b16 %v1602, %v1601
    %v1645 = vpack.c.b16 %v1604, %v1603
    %v1646 = vpack.c.b16 %v1606, %v1605
    %v1647 = vpack.c.b16 %v1608, %v1607
    %v1648 = vpack.c.b16 %v1610, %v1609
    %v1649 = vpack.c.b16 %v1612, %v1611
    %v1650 = vpack.c.b16 %v1614, %v1613
    %v1651 = vpack.c.b16 %v1616, %v1615
    %v1652 = vpack.c.b16 %v1618, %v1617
    %v1653 = vpack.c.b16 %v1620, %v1619
    %v1654 = vpack.c.b16 %v1622, %v1621
    %v1655 = vpack.c.b16 %v1624, %v1623
    %v1656 = vpack.c.b16 %v1626, %v1625
    %v1657 = vpack.c.b16 %v1628, %v1627
    %v1658 = vpack.c.b16 %v1630, %v1629
    %v1659 = vpack.c.b16 %v1632, %v1631
    %v1660 = vpack.c.b16 %v1634, %v1633
    %v1661 = vpack.c.b16 %v1636, %v1635
    %v1662 = vpack.c.b16 %v1638, %v1637
    %1687 = vmatprep.subr.bf16.mxu0 0
    %1688 = vmatpush1.bf16.msra.mxu0 %v1639
    %1689 = vmatprep.subr.bf16.mxu0 0
    %1690 = vmatpush1.bf16.msra.mxu0 %v1640
    %1691 = vmatprep.subr.bf16.mxu0 0
    %1692 = vmatpush1.bf16.msra.mxu0 %v1641
    %1693 = vmatprep.subr.bf16.mxu0 0
    %1694 = vmatpush1.bf16.msra.mxu0 %v1642
    %1695 = vmatprep.subr.bf16.mxu0 0
    %1696 = vmatpush1.bf16.msra.mxu0 %v1643
    %1697 = vmatprep.subr.bf16.mxu0 0
    %1698 = vmatpush1.bf16.msra.mxu0 %v1644
    %1699 = vmatprep.subr.bf16.mxu0 0
    %1700 = vmatpush1.bf16.msra.mxu0 %v1645
    %1701 = vmatprep.subr.bf16.mxu0 0
    %1702 = vmatpush1.bf16.msra.mxu0 %v1646
    %1703 = vmatprep.subr.bf16.mxu0 0
    %1704 = vmatpush1.bf16.msra.mxu0 %v1647
    %1705 = vmatprep.subr.bf16.mxu0 0
    %1706 = vmatpush1.bf16.msra.mxu0 %v1648
    %1707 = vmatprep.subr.bf16.mxu0 0
    %1708 = vmatpush1.bf16.msra.mxu0 %v1649
    %1709 = vmatprep.subr.bf16.mxu0 0
    %1710 = vmatpush1.bf16.msra.mxu0 %v1650
    %1711 = vmatprep.subr.bf16.mxu0 0
    %1712 = vmatpush1.bf16.msra.mxu0 %v1651
    %1713 = vmatprep.subr.bf16.mxu0 0
    %1714 = vmatpush1.bf16.msra.mxu0 %v1652
    %1715 = vmatprep.subr.bf16.mxu0 0
    %1716 = vmatpush1.bf16.msra.mxu0 %v1653
    %1717 = vmatprep.subr.bf16.mxu0 0
    %1718 = vmatpush1.bf16.msra.mxu0 %v1654
    %1719 = vmatprep.mubr.bf16.mxu0 %v1486
    %1720 = vmatmul.mubr.bf16.gmra.mrb[0].mxu0 %v1485
    %v1721 = vpop.f32.mrb[0].mxu0
    %v1722 = vadd.f32 %v1541, %v1721
    %v1723 = vpop.f32.mrb[0].mxu0
    %v1724 = vpop.f32.mrb[0].mxu0
    %v1725 = vpop.f32.mrb[0].mxu0
    %1726 = vdwg.mxu0
    %1727 = vmatprep.subr.bf16.mxu0 0
    %1728 = vmatpush1.bf16.msra.mxu0 %v1655
    %1729 = vmatprep.subr.bf16.mxu0 0
    %1730 = vmatpush1.bf16.msra.mxu0 %v1656
    %1731 = vmatprep.subr.bf16.mxu0 0
    %1732 = vmatpush1.bf16.msra.mxu0 %v1657
    %1733 = vmatprep.subr.bf16.mxu0 0
    %1734 = vmatpush1.bf16.msra.mxu0 %v1658
    %1735 = vmatprep.subr.bf16.mxu0 0
    %1736 = vmatpush1.bf16.msra.mxu0 %v1659
    %1737 = vmatprep.subr.bf16.mxu0 0
    %1738 = vmatpush1.bf16.msra.mxu0 %v1660
    %1739 = vmatprep.subr.bf16.mxu0 0
    %1740 = vmatpush1.bf16.msra.mxu0 %v1661
    %1741 = vmatprep.subr.bf16.mxu0 0
    %1742 = vmatpush1.bf16.msra.mxu0 %v1662
    %1743 = vmatprep.subr.bf16.mxu0 0
    %1744 = vmatpush1.bf16.msra.mxu0 0
    %1745 = vmatprep.subr.bf16.mxu0 0
    %1746 = vmatpush1.bf16.msra.mxu0 0
    %1747 = vmatprep.subr.bf16.mxu0 0
    %1748 = vmatpush1.bf16.msra.mxu0 0
    %1749 = vmatprep.subr.bf16.mxu0 0
    %1750 = vmatpush1.bf16.msra.mxu0 0
    %1751 = vmatprep.subr.bf16.mxu0 0
    %1752 = vmatpush1.bf16.msra.mxu0 0
    %1753 = vmatprep.subr.bf16.mxu0 0
    %1754 = vmatpush1.bf16.msra.mxu0 0
    %1755 = vmatprep.subr.bf16.mxu0 0
    %1756 = vmatpush1.bf16.msra.mxu0 0
    %1757 = vmatprep.subr.bf16.mxu0 0
    %1758 = vmatpush1.bf16.msra.mxu0 0
    %1759 = vmatprep.mubr.bf16.mxu0 0
    %1760 = vmatmul.mubr.bf16.gmra.mrb[0].mxu0 %v1487
    %v1761 = vpop.f32.mrb[0].mxu0
    %v1762 = vadd.f32 %v1722, %v1761
    %v1763 = vpop.f32.mrb[0].mxu0
    %v1764 = vpop.f32.mrb[0].mxu0
    %v1765 = vpop.f32.mrb[0].mxu0
    %1766 = vdwg.mxu0
    %v1767 = vpack.c.bf16 %v1762, %v1762
    %1768 = vst [vmem:[#allocation8] sm:$0xf] %v1767
    // Predicated region
    $region34: #{tpu_custom_call.1} parent=1 // pred_check
      _
    $region35: #{tpu_custom_call.1} parent=1 // pred_check_branch
      %1770 = sbr.rel (0) target = $region37
    $region36: #{tpu_custom_call.1} parent=1 // pred_region
      %s1772 = ssub.s32 64, 64
      %1773 = vsyncadd [#allocation4], %s1772
      %s1775 = sshll.u32 [#allocation8], 4
      %s1776 = int_to_ptr.vmem [resolvable:$true] %s1775
      %1778 = dma.vmem_to_hbm [thread:$0]  %s1776, 64, %s5, [#allocation4]
    $region37: #{tpu_custom_call.1} parent=1 // pred_fallthru
      _
    // Predicated region
    $region38: #{tpu_custom_call.1} parent=1 // pred_check
      _
    $region39: #{tpu_custom_call.1} parent=1 // pred_check_branch
      %1780 = sbr.rel (0) target = $region41
    $region40: #{tpu_custom_call.1} parent=1 // pred_region
      %1781 = dma.done [#allocation4], 64
    $region41: #{tpu_custom_call.1} parent=1 // pred_fallthru
      _
    %1782 = vsyncpa [#allocation3], 1
    %1783 = vsyncpa [#allocation6], 1
    %1784 = vsyncpa [#allocation4], 1

</llo_original>
